<compile_context>
chip_gen: v7x
topology: tpu7x:2x2x1
jax: 0.10.0
libtpu: 0.0.40
codegen_flags: <defaults>
</compile_context>

<pallas_src>
import functools

import numpy as np
import jax
import jax.numpy as jnp
from jax import lax
from jax.experimental import pallas as pl
from jax.experimental.pallas import tpu as pltpu

# ---- small, module-consistent config (LeFF defaults dim=32, hidden_dim=128) ----
DIM = 32
HIDDEN = 128
H_IMG = 8
W_IMG = 8
BATCH = 2
SEQ = H_IMG * W_IMG

_SQRT_HALF = float(1.0 / np.sqrt(2.0))


def _erf_f32(x):
    # Abramowitz & Stegun 7.1.26 rational approximation, |err| <= 1.5e-7 (~f32 eps).
    # The reciprocal goes through the EUP (approx) plus one Newton step, keeping the exact
    # multi-step divide off the VALU critical path.
    p = 0.3275911
    a1, a2, a3, a4, a5 = 0.254829592, -0.284496736, 1.421413741, -1.453152027, 1.061405429
    s = jnp.where(x < 0.0, -1.0, 1.0)
    ax = jnp.abs(x)
    d = 1.0 + p * ax
    t = pl.reciprocal(d, approx=True)
    t = t * (2.0 - d * t)                                   # one Newton step -> ~f32 accuracy
    poly = ((((a5 * t + a4) * t + a3) * t + a2) * t + a1) * t
    return s * (1.0 - poly * jnp.exp(-ax * ax))


def _gelu_exact(x):
    # torch nn.GELU() default is the exact erf-based GELU.
    return 0.5 * x * (1.0 + _erf_f32(x * _SQRT_HALF))


def leff_kernel(x_ref, yy_ref, xx_ref, w1_ref, b1_ref, cw_ref, cb_ref, w2_ref, b2_ref,
                o_ref, *, img_h, img_w):
    m = x_ref.shape[0]                 # nb * H * W token rows in this batch block
    c = w1_ref.shape[1]                # hidden channels, mapped onto the 128-lane axis

    # ---- linear1 (bf16 MXU operands, f32 accumulate) + exact GELU (f32) ----
    x = x_ref[...].astype(jnp.bfloat16)
    h1 = jnp.dot(x, w1_ref[...], preferred_element_type=jnp.float32) + b1_ref[...]
    h1 = _gelu_exact(h1)                                    # (m, c) f32

    # ---- depthwise 3x3 conv (padding=1) + GELU: shifted accumulation in registers ----
    # flat row index r = b*H*W + y*W + x; tap (dy, dx) reads row r + (dy-1)*W + (dx-1),
    # realized as a sublane roll of the whole slab + border masks.  Image borders coincide
    # with batch-block borders, so rows rolled in from neighbouring images are always masked.
    yy = yy_ref[...]                                        # (m, 1) int32 row-in-image
    xx = xx_ref[...]                                        # (m, 1) int32 col-in-image
    row_m = (jnp.where(yy >= 1, 1.0, 0.0), None, jnp.where(yy <= img_h - 2, 1.0, 0.0))
    col_m = (jnp.where(xx >= 1, 1.0, 0.0), None, jnp.where(xx <= img_w - 2, 1.0, 0.0))

    cwv = cw_ref[...]                                       # (9, c) tap table, resident in vregs
    acc = jnp.zeros((m, c), jnp.float32)
    for dy in range(3):                                     # cross-correlation, as in torch Conv2d
        for dx in range(3):
            off = (dy - 1) * img_w + (dx - 1)
            v = h1 if off == 0 else pltpu.roll(h1, shift=(-off) % m, axis=0)
            mask = row_m[dy]
            if col_m[dx] is not None:
                mask = col_m[dx] if mask is None else mask * col_m[dx]
            if mask is not None:
                v = v * mask                                # (m, 1) broadcast across lanes
            acc = acc + v * cwv[dy * 3 + dx: dy * 3 + dx + 1, :]
    act = _gelu_exact(acc + cb_ref[...])                    # (m, c) f32

    # ---- linear2 (bf16 MXU operands, f32 accumulate) ----
    out = jnp.dot(act.astype(jnp.bfloat16), w2_ref[...],
                  preferred_element_type=jnp.float32) + b2_ref[...]
    o_ref[...] = out.astype(o_ref.dtype)


def _pick_batch_block(bs, seq, target_rows=512, max_rows=2048):
    # Rows per grid step: big enough M to fill the MXU, small enough to stay well inside VMEM,
    # and (when the batch allows it) >= 2 grid steps so both v7x TensorCores get work.
    divisors = [d for d in range(1, bs + 1) if bs % d == 0]
    fits = [d for d in divisors if d * seq <= max_rows] or [1]
    reach = [d for d in fits if d * seq >= target_rows]
    nb = reach[0] if reach else fits[-1]
    if bs // nb < 2:
        two_blocks = [d for d in fits if bs // d >= 2]
        if two_blocks and two_blocks[-1] * seq >= target_rows:
            nb = two_blocks[-1]
    return nb


def leff_forward(x, w1, b1, cw, cb, w2, b2, img_h, img_w, batch_block=None):
    bs, seq, dim = x.shape
    hidden = w1.shape[1]
    assert seq == img_h * img_w
    nb = batch_block if batch_block is not None else _pick_batch_block(bs, seq)
    assert bs % nb == 0, "batch block must divide the batch"
    rows = nb * seq
    grid = (bs // nb,)
    assert grid[0] == 1 or rows % 8 == 0, "per-step row count must be sublane aligned"

    x2d = x.reshape(bs * seq, dim)                 # flatten: big-M matmuls per grid step
    w1b = w1.astype(jnp.bfloat16)                  # bf16 weights: single-pass MXU, half the DMA
    w2b = w2.astype(jnp.bfloat16)
    cw9 = cw.reshape(9, hidden)                    # (ky*3 + kx, c) tap table

    # per-row (y, x) coordinates inside one batch block; the pattern repeats for every block,
    # so a single constant (rows, 1) table is shared by all grid steps (no in-kernel div/mod).
    ridx = np.arange(rows, dtype=np.int32)
    yy = jnp.asarray(((ridx // img_w) % img_h).reshape(rows, 1))
    xx = jnp.asarray((ridx % img_w).reshape(rows, 1))

    # crude per-step VMEM estimate (a few f32 activation copies + double-buffered I/O blocks)
    # TODO(synk): for very large images (e.g. 128x128), tile H with a halo instead of growing VMEM.
    est = rows * hidden * 4 * 8 + rows * max(dim, 128) * 4 * 4
    vmem_limit = int(min(max(est, 32 << 20), 64 << 20))

    kernel = functools.partial(leff_kernel, img_h=img_h, img_w=img_w)
    out2d = pl.pallas_call(
        kernel,
        out_shape=jax.ShapeDtypeStruct((bs * seq, dim), x.dtype),
        grid=grid,
        in_specs=[
            pl.BlockSpec((rows, dim), lambda b: (b, 0)),      # x rows of this batch block
            pl.BlockSpec((rows, 1), lambda b: (0, 0)),        # per-row y coordinate
            pl.BlockSpec((rows, 1), lambda b: (0, 0)),        # per-row x coordinate
            pl.BlockSpec((dim, hidden), lambda b: (0, 0)),    # w1 (bf16)
            pl.BlockSpec((1, hidden), lambda b: (0, 0)),      # b1
            pl.BlockSpec((9, hidden), lambda b: (0, 0)),      # depthwise conv taps (9, c)
            pl.BlockSpec((1, hidden), lambda b: (0, 0)),      # conv bias
            pl.BlockSpec((hidden, dim), lambda b: (0, 0)),    # w2 (bf16)
            pl.BlockSpec((1, dim), lambda b: (0, 0)),         # b2
        ],
        out_specs=pl.BlockSpec((rows, dim), lambda b: (b, 0)),
        compiler_params=pltpu.CompilerParams(
            dimension_semantics=("parallel",),
            vmem_limit_bytes=vmem_limit),
    )(x2d, yy, xx, w1b, b1, cw9, cb, w2b, b2)
    return out2d.reshape(bs, seq, dim)


def leff_reference(x, w1, b1, cw, cb, w2, b2, img_h, img_w):
    # Pure-JAX reference with the same matmul numerics as the kernel (bf16 operands, f32
    # accumulation), exact GELU, and an f32 XLA depthwise conv.
    hidden = w1.shape[1]
    bf = lambda a: a.astype(jnp.bfloat16)
    h1 = jnp.dot(bf(x), bf(w1), preferred_element_type=jnp.float32) + b1
    h1 = jax.nn.gelu(h1, approximate=False)
    img = h1.reshape(x.shape[0], img_h, img_w, hidden)                   # NHWC
    k = cw[:, :, None, :]                                                # HWIO, 1 in-chan / group
    conv = lax.conv_general_dilated(
        img, k, window_strides=(1, 1), padding="SAME",
        dimension_numbers=("NHWC", "HWIO", "NHWC"),
        feature_group_count=hidden, precision=lax.Precision.HIGHEST)
    act = jax.nn.gelu(conv + cb.reshape(1, 1, 1, hidden), approximate=False)
    out = jnp.dot(bf(act.reshape(x.shape[0], img_h * img_w, hidden)), bf(w2),
                  preferred_element_type=jnp.float32) + b2
    return out


if __name__ == "__main__":
    key = jax.random.PRNGKey(0)
    kx, k1, k2, k3, k4, k5, k6 = jax.random.split(key, 7)

    # deterministic synthetic parameters (shapes from LeFF.__init__: dim=32, hidden_dim=128)
    x = jax.random.normal(kx, (BATCH, SEQ, DIM), jnp.float32)
    w1 = jax.random.normal(k1, (DIM, HIDDEN), jnp.float32) * (1.0 / np.sqrt(DIM))
    b1 = jax.random.normal(k2, (1, HIDDEN), jnp.float32) * 0.02
    # torch Conv2d weight is (C, 1, 3, 3); stored here as (3, 3, C): cw[ky, kx, c] == w[c, 0, ky, kx]
    cw = jax.random.normal(k3, (3, 3, HIDDEN), jnp.float32) * (1.0 / 3.0)
    cb = jax.random.normal(k4, (1, HIDDEN), jnp.float32) * 0.02
    w2 = jax.random.normal(k5, (HIDDEN, DIM), jnp.float32) * (1.0 / np.sqrt(HIDDEN))
    b2 = jax.random.normal(k6, (1, DIM), jnp.float32) * 0.02

    out = jax.block_until_ready(leff_forward(x, w1, b1, cw, cb, w2, b2, H_IMG, W_IMG))
    ref = jax.block_until_ready(leff_reference(x, w1, b1, cw, cb, w2, b2, H_IMG, W_IMG))

    err = float(jnp.max(jnp.abs(out - ref)))
    if not np.isfinite(err) or err > 2e-3:
        raise AssertionError(f"Pallas LeFF mismatch vs reference: max abs err {err}")

    print("KERNEL_OK")
</pallas_src>

<mosaic_0001>
module attributes {stable_mosaic.version = 11 : i64} {
  func.func @leff_kernel(%arg0: i32, %arg1: memref<128x32xf32, #tpu.memory_space<vmem>>, %arg2: memref<128x1xi32, #tpu.memory_space<vmem>>, %arg3: memref<128x1xi32, #tpu.memory_space<vmem>>, %arg4: memref<32x128xbf16, #tpu.memory_space<vmem>>, %arg5: memref<1x128xf32, #tpu.memory_space<vmem>>, %arg6: memref<9x128xf32, #tpu.memory_space<vmem>>, %arg7: memref<1x128xf32, #tpu.memory_space<vmem>>, %arg8: memref<128x32xbf16, #tpu.memory_space<vmem>>, %arg9: memref<1x32xf32, #tpu.memory_space<vmem>>, %arg10: memref<128x32xf32, #tpu.memory_space<vmem>>) attributes {dimension_semantics = [#tpu.dimension_semantics<parallel>], iteration_bounds = array<i64: 1>, scalar_prefetch = 0 : i64, scratch_operands = 0 : i64, tpu.core_type = #tpu.core_type<tc>, window_params = [{transform_indices = @transform_0, window_bounds = array<i64: 128, 32>}, {pipeline_mode = #tpu.pipeline_mode<synchronous>, transform_indices = @transform_1, window_bounds = array<i64: 128, 1>}, {pipeline_mode = #tpu.pipeline_mode<synchronous>, transform_indices = @transform_2, window_bounds = array<i64: 128, 1>}, {pipeline_mode = #tpu.pipeline_mode<synchronous>, transform_indices = @transform_3, window_bounds = array<i64: 32, 128>}, {pipeline_mode = #tpu.pipeline_mode<synchronous>, transform_indices = @transform_4, window_bounds = array<i64: 1, 128>}, {pipeline_mode = #tpu.pipeline_mode<synchronous>, transform_indices = @transform_5, window_bounds = array<i64: 9, 128>}, {pipeline_mode = #tpu.pipeline_mode<synchronous>, transform_indices = @transform_6, window_bounds = array<i64: 1, 128>}, {pipeline_mode = #tpu.pipeline_mode<synchronous>, transform_indices = @transform_7, window_bounds = array<i64: 128, 32>}, {pipeline_mode = #tpu.pipeline_mode<synchronous>, transform_indices = @transform_8, window_bounds = array<i64: 1, 32>}, {transform_indices = @transform_9, window_bounds = array<i64: 128, 32>}]} {
    %c0 = arith.constant 0 : index
    %c0_0 = arith.constant 0 : index
    %0 = vector.load %arg1[%c0, %c0_0] : memref<128x32xf32, #tpu.memory_space<vmem>>, vector<128x32xf32>
    %1 = arith.truncf %0 : vector<128x32xf32> to vector<128x32xbf16>
    %c0_1 = arith.constant 0 : index
    %c0_2 = arith.constant 0 : index
    %2 = vector.load %arg4[%c0_1, %c0_2] : memref<32x128xbf16, #tpu.memory_space<vmem>>, vector<32x128xbf16>
    %cst = arith.constant dense<0.000000e+00> : vector<128x128xf32>
    %3 = tpu.matmul %1, %2, %cst {dimension_numbers = #tpu.dot_dimension_numbers<[1], [0], [0], [1], [0, 0, 1, 1], [], []>} : vector<128x32xbf16>, vector<32x128xbf16>, vector<128x128xf32> -> vector<128x128xf32>
    %c0_3 = arith.constant 0 : index
    %c0_4 = arith.constant 0 : index
    %4 = vector.load %arg5[%c0_3, %c0_4] : memref<1x128xf32, #tpu.memory_space<vmem>>, vector<1x128xf32>
    %5 = vector.broadcast %4 : vector<1x128xf32> to vector<128x128xf32>
    %6 = arith.addf %3, %5 : vector<128x128xf32>
    %cst_5 = arith.constant 5.000000e-01 : f32
    %7 = vector.broadcast %cst_5 : f32 to vector<128x128xf32>
    %8 = arith.mulf %7, %6 : vector<128x128xf32>
    %cst_6 = arith.constant 0.707106769 : f32
    %9 = vector.broadcast %cst_6 : f32 to vector<128x128xf32>
    %10 = arith.mulf %6, %9 : vector<128x128xf32>
    %cst_7 = arith.constant 0.000000e+00 : f32
    %11 = vector.broadcast %cst_7 : f32 to vector<128x128xf32>
    %12 = arith.cmpf olt, %10, %11 : vector<128x128xf32>
    %cst_8 = arith.constant -1.000000e+00 : f32
    %cst_9 = arith.constant 1.000000e+00 : f32
    %13 = vector.broadcast %cst_8 : f32 to vector<128x128xf32>
    %14 = vector.broadcast %cst_9 : f32 to vector<128x128xf32>
    %15 = arith.select %12, %13, %14 : vector<128x128xi1>, vector<128x128xf32>
    %16 = math.absf %10 : vector<128x128xf32>
    %cst_10 = arith.constant 0.327591091 : f32
    %17 = vector.broadcast %cst_10 : f32 to vector<128x128xf32>
    %18 = arith.mulf %17, %16 : vector<128x128xf32>
    %cst_11 = arith.constant 1.000000e+00 : f32
    %19 = vector.broadcast %cst_11 : f32 to vector<128x128xf32>
    %20 = arith.addf %19, %18 : vector<128x128xf32>
    %21 = tpu.reciprocal %20 {approx = true} : vector<128x128xf32> -> vector<128x128xf32>
    %22 = arith.mulf %20, %21 : vector<128x128xf32>
    %cst_12 = arith.constant 2.000000e+00 : f32
    %23 = vector.broadcast %cst_12 : f32 to vector<128x128xf32>
    %24 = arith.subf %23, %22 : vector<128x128xf32>
    %25 = arith.mulf %21, %24 : vector<128x128xf32>
    %cst_13 = arith.constant 1.06140542 : f32
    %26 = vector.broadcast %cst_13 : f32 to vector<128x128xf32>
    %27 = arith.mulf %26, %25 : vector<128x128xf32>
    %cst_14 = arith.constant -1.45315206 : f32
    %28 = vector.broadcast %cst_14 : f32 to vector<128x128xf32>
    %29 = arith.addf %27, %28 : vector<128x128xf32>
    %30 = arith.mulf %29, %25 : vector<128x128xf32>
    %cst_15 = arith.constant 1.42141378 : f32
    %31 = vector.broadcast %cst_15 : f32 to vector<128x128xf32>
    %32 = arith.addf %30, %31 : vector<128x128xf32>
    %33 = arith.mulf %32, %25 : vector<128x128xf32>
    %cst_16 = arith.constant -0.284496725 : f32
    %34 = vector.broadcast %cst_16 : f32 to vector<128x128xf32>
    %35 = arith.addf %33, %34 : vector<128x128xf32>
    %36 = arith.mulf %35, %25 : vector<128x128xf32>
    %cst_17 = arith.constant 0.254829586 : f32
    %37 = vector.broadcast %cst_17 : f32 to vector<128x128xf32>
    %38 = arith.addf %36, %37 : vector<128x128xf32>
    %39 = arith.mulf %38, %25 : vector<128x128xf32>
    %cst_18 = arith.constant 0.000000e+00 : f32
    %40 = vector.broadcast %cst_18 : f32 to vector<128x128xf32>
    %41 = arith.subf %40, %16 : vector<128x128xf32>
    %42 = arith.mulf %41, %16 : vector<128x128xf32>
    %43 = math.exp %42 : vector<128x128xf32>
    %44 = arith.mulf %39, %43 : vector<128x128xf32>
    %cst_19 = arith.constant 1.000000e+00 : f32
    %45 = vector.broadcast %cst_19 : f32 to vector<128x128xf32>
    %46 = arith.subf %45, %44 : vector<128x128xf32>
    %47 = arith.mulf %15, %46 : vector<128x128xf32>
    %cst_20 = arith.constant 1.000000e+00 : f32
    %48 = vector.broadcast %cst_20 : f32 to vector<128x128xf32>
    %49 = arith.addf %48, %47 : vector<128x128xf32>
    %50 = arith.mulf %8, %49 : vector<128x128xf32>
    %c0_21 = arith.constant 0 : index
    %c0_22 = arith.constant 0 : index
    %51 = vector.load %arg2[%c0_21, %c0_22] : memref<128x1xi32, #tpu.memory_space<vmem>>, vector<128x1xi32>
    %c0_23 = arith.constant 0 : index
    %c0_24 = arith.constant 0 : index
    %52 = vector.load %arg3[%c0_23, %c0_24] : memref<128x1xi32, #tpu.memory_space<vmem>>, vector<128x1xi32>
    %c1_i32 = arith.constant 1 : i32
    %53 = vector.broadcast %c1_i32 : i32 to vector<128x1xi32>
    %54 = arith.cmpi sge, %51, %53 : vector<128x1xi32>
    %cst_25 = arith.constant 1.000000e+00 : f32
    %cst_26 = arith.constant 0.000000e+00 : f32
    %55 = vector.broadcast %cst_25 : f32 to vector<128x1xf32>
    %56 = vector.broadcast %cst_26 : f32 to vector<128x1xf32>
    %57 = arith.select %54, %55, %56 : vector<128x1xi1>, vector<128x1xf32>
    %c6_i32 = arith.constant 6 : i32
    %58 = vector.broadcast %c6_i32 : i32 to vector<128x1xi32>
    %59 = arith.cmpi sle, %51, %58 : vector<128x1xi32>
    %cst_27 = arith.constant 1.000000e+00 : f32
    %cst_28 = arith.constant 0.000000e+00 : f32
    %60 = vector.broadcast %cst_27 : f32 to vector<128x1xf32>
    %61 = vector.broadcast %cst_28 : f32 to vector<128x1xf32>
    %62 = arith.select %59, %60, %61 : vector<128x1xi1>, vector<128x1xf32>
    %c1_i32_29 = arith.constant 1 : i32
    %63 = vector.broadcast %c1_i32_29 : i32 to vector<128x1xi32>
    %64 = arith.cmpi sge, %52, %63 : vector<128x1xi32>
    %cst_30 = arith.constant 1.000000e+00 : f32
    %cst_31 = arith.constant 0.000000e+00 : f32
    %65 = vector.broadcast %cst_30 : f32 to vector<128x1xf32>
    %66 = vector.broadcast %cst_31 : f32 to vector<128x1xf32>
    %67 = arith.select %64, %65, %66 : vector<128x1xi1>, vector<128x1xf32>
    %c6_i32_32 = arith.constant 6 : i32
    %68 = vector.broadcast %c6_i32_32 : i32 to vector<128x1xi32>
    %69 = arith.cmpi sle, %52, %68 : vector<128x1xi32>
    %cst_33 = arith.constant 1.000000e+00 : f32
    %cst_34 = arith.constant 0.000000e+00 : f32
    %70 = vector.broadcast %cst_33 : f32 to vector<128x1xf32>
    %71 = vector.broadcast %cst_34 : f32 to vector<128x1xf32>
    %72 = arith.select %69, %70, %71 : vector<128x1xi1>, vector<128x1xf32>
    %c0_35 = arith.constant 0 : index
    %c0_36 = arith.constant 0 : index
    %73 = vector.load %arg6[%c0_35, %c0_36] : memref<9x128xf32, #tpu.memory_space<vmem>>, vector<9x128xf32>
    %cst_37 = arith.constant 0.000000e+00 : f32
    %74 = vector.broadcast %cst_37 : f32 to vector<128x128xf32>
    %c9_i32 = arith.constant 9 : i32
    %75 = tpu.dynamic_rotate %50 by %c9_i32 dim 0 : vector<128x128xf32>, i32 -> vector<128x128xf32>
    %76 = arith.mulf %57, %67 : vector<128x1xf32>
    %77 = vector.broadcast %76 : vector<128x1xf32> to vector<128x128xf32>
    %78 = arith.mulf %75, %77 : vector<128x128xf32>
    %79 = vector.extract_strided_slice %73 {offsets = [0, 0], sizes = [1, 128], strides = [1, 1]} : vector<9x128xf32> to vector<1x128xf32>
    %80 = vector.broadcast %79 : vector<1x128xf32> to vector<128x128xf32>
    %81 = arith.mulf %78, %80 : vector<128x128xf32>
    %82 = arith.addf %74, %81 : vector<128x128xf32>
    %c8_i32 = arith.constant 8 : i32
    %83 = tpu.dynamic_rotate %50 by %c8_i32 dim 0 : vector<128x128xf32>, i32 -> vector<128x128xf32>
    %84 = vector.broadcast %57 : vector<128x1xf32> to vector<128x128xf32>
    %85 = arith.mulf %83, %84 : vector<128x128xf32>
    %86 = vector.extract_strided_slice %73 {offsets = [1, 0], sizes = [1, 128], strides = [1, 1]} : vector<9x128xf32> to vector<1x128xf32>
    %87 = vector.broadcast %86 : vector<1x128xf32> to vector<128x128xf32>
    %88 = arith.mulf %85, %87 : vector<128x128xf32>
    %89 = arith.addf %82, %88 : vector<128x128xf32>
    %c7_i32 = arith.constant 7 : i32
    %90 = tpu.dynamic_rotate %50 by %c7_i32 dim 0 : vector<128x128xf32>, i32 -> vector<128x128xf32>
    %91 = arith.mulf %57, %72 : vector<128x1xf32>
    %92 = vector.broadcast %91 : vector<128x1xf32> to vector<128x128xf32>
    %93 = arith.mulf %90, %92 : vector<128x128xf32>
    %94 = vector.extract_strided_slice %73 {offsets = [2, 0], sizes = [1, 128], strides = [1, 1]} : vector<9x128xf32> to vector<1x128xf32>
    %95 = vector.broadcast %94 : vector<1x128xf32> to vector<128x128xf32>
    %96 = arith.mulf %93, %95 : vector<128x128xf32>
    %97 = arith.addf %89, %96 : vector<128x128xf32>
    %c1_i32_38 = arith.constant 1 : i32
    %98 = tpu.dynamic_rotate %50 by %c1_i32_38 dim 0 : vector<128x128xf32>, i32 -> vector<128x128xf32>
    %99 = vector.broadcast %67 : vector<128x1xf32> to vector<128x128xf32>
    %100 = arith.mulf %98, %99 : vector<128x128xf32>
    %101 = vector.extract_strided_slice %73 {offsets = [3, 0], sizes = [1, 128], strides = [1, 1]} : vector<9x128xf32> to vector<1x128xf32>
    %102 = vector.broadcast %101 : vector<1x128xf32> to vector<128x128xf32>
    %103 = arith.mulf %100, %102 : vector<128x128xf32>
    %104 = arith.addf %97, %103 : vector<128x128xf32>
    %105 = vector.extract_strided_slice %73 {offsets = [4, 0], sizes = [1, 128], strides = [1, 1]} : vector<9x128xf32> to vector<1x128xf32>
    %106 = vector.broadcast %105 : vector<1x128xf32> to vector<128x128xf32>
    %107 = arith.mulf %50, %106 : vector<128x128xf32>
    %108 = arith.addf %104, %107 : vector<128x128xf32>
    %c127_i32 = arith.constant 127 : i32
    %109 = tpu.dynamic_rotate %50 by %c127_i32 dim 0 : vector<128x128xf32>, i32 -> vector<128x128xf32>
    %110 = vector.broadcast %72 : vector<128x1xf32> to vector<128x128xf32>
    %111 = arith.mulf %109, %110 : vector<128x128xf32>
    %112 = vector.extract_strided_slice %73 {offsets = [5, 0], sizes = [1, 128], strides = [1, 1]} : vector<9x128xf32> to vector<1x128xf32>
    %113 = vector.broadcast %112 : vector<1x128xf32> to vector<128x128xf32>
    %114 = arith.mulf %111, %113 : vector<128x128xf32>
    %115 = arith.addf %108, %114 : vector<128x128xf32>
    %c121_i32 = arith.constant 121 : i32
    %116 = tpu.dynamic_rotate %50 by %c121_i32 dim 0 : vector<128x128xf32>, i32 -> vector<128x128xf32>
    %117 = arith.mulf %62, %67 : vector<128x1xf32>
    %118 = vector.broadcast %117 : vector<128x1xf32> to vector<128x128xf32>
    %119 = arith.mulf %116, %118 : vector<128x128xf32>
    %120 = vector.extract_strided_slice %73 {offsets = [6, 0], sizes = [1, 128], strides = [1, 1]} : vector<9x128xf32> to vector<1x128xf32>
    %121 = vector.broadcast %120 : vector<1x128xf32> to vector<128x128xf32>
    %122 = arith.mulf %119, %121 : vector<128x128xf32>
    %123 = arith.addf %115, %122 : vector<128x128xf32>
    %c120_i32 = arith.constant 120 : i32
    %124 = tpu.dynamic_rotate %50 by %c120_i32 dim 0 : vector<128x128xf32>, i32 -> vector<128x128xf32>
    %125 = vector.broadcast %62 : vector<128x1xf32> to vector<128x128xf32>
    %126 = arith.mulf %124, %125 : vector<128x128xf32>
    %127 = vector.extract_strided_slice %73 {offsets = [7, 0], sizes = [1, 128], strides = [1, 1]} : vector<9x128xf32> to vector<1x128xf32>
    %128 = vector.broadcast %127 : vector<1x128xf32> to vector<128x128xf32>
    %129 = arith.mulf %126, %128 : vector<128x128xf32>
    %130 = arith.addf %123, %129 : vector<128x128xf32>
    %c119_i32 = arith.constant 119 : i32
    %131 = tpu.dynamic_rotate %50 by %c119_i32 dim 0 : vector<128x128xf32>, i32 -> vector<128x128xf32>
    %132 = arith.mulf %62, %72 : vector<128x1xf32>
    %133 = vector.broadcast %132 : vector<128x1xf32> to vector<128x128xf32>
    %134 = arith.mulf %131, %133 : vector<128x128xf32>
    %135 = vector.extract_strided_slice %73 {offsets = [8, 0], sizes = [1, 128], strides = [1, 1]} : vector<9x128xf32> to vector<1x128xf32>
    %136 = vector.broadcast %135 : vector<1x128xf32> to vector<128x128xf32>
    %137 = arith.mulf %134, %136 : vector<128x128xf32>
    %138 = arith.addf %130, %137 : vector<128x128xf32>
    %c0_39 = arith.constant 0 : index
    %c0_40 = arith.constant 0 : index
    %139 = vector.load %arg7[%c0_39, %c0_40] : memref<1x128xf32, #tpu.memory_space<vmem>>, vector<1x128xf32>
    %140 = vector.broadcast %139 : vector<1x128xf32> to vector<128x128xf32>
    %141 = arith.addf %138, %140 : vector<128x128xf32>
    %cst_41 = arith.constant 5.000000e-01 : f32
    %142 = vector.broadcast %cst_41 : f32 to vector<128x128xf32>
    %143 = arith.mulf %142, %141 : vector<128x128xf32>
    %cst_42 = arith.constant 0.707106769 : f32
    %144 = vector.broadcast %cst_42 : f32 to vector<128x128xf32>
    %145 = arith.mulf %141, %144 : vector<128x128xf32>
    %cst_43 = arith.constant 0.000000e+00 : f32
    %146 = vector.broadcast %cst_43 : f32 to vector<128x128xf32>
    %147 = arith.cmpf olt, %145, %146 : vector<128x128xf32>
    %cst_44 = arith.constant -1.000000e+00 : f32
    %cst_45 = arith.constant 1.000000e+00 : f32
    %148 = vector.broadcast %cst_44 : f32 to vector<128x128xf32>
    %149 = vector.broadcast %cst_45 : f32 to vector<128x128xf32>
    %150 = arith.select %147, %148, %149 : vector<128x128xi1>, vector<128x128xf32>
    %151 = math.absf %145 : vector<128x128xf32>
    %cst_46 = arith.constant 0.327591091 : f32
    %152 = vector.broadcast %cst_46 : f32 to vector<128x128xf32>
    %153 = arith.mulf %152, %151 : vector<128x128xf32>
    %cst_47 = arith.constant 1.000000e+00 : f32
    %154 = vector.broadcast %cst_47 : f32 to vector<128x128xf32>
    %155 = arith.addf %154, %153 : vector<128x128xf32>
    %156 = tpu.reciprocal %155 {approx = true} : vector<128x128xf32> -> vector<128x128xf32>
    %157 = arith.mulf %155, %156 : vector<128x128xf32>
    %cst_48 = arith.constant 2.000000e+00 : f32
    %158 = vector.broadcast %cst_48 : f32 to vector<128x128xf32>
    %159 = arith.subf %158, %157 : vector<128x128xf32>
    %160 = arith.mulf %156, %159 : vector<128x128xf32>
    %cst_49 = arith.constant 1.06140542 : f32
    %161 = vector.broadcast %cst_49 : f32 to vector<128x128xf32>
    %162 = arith.mulf %161, %160 : vector<128x128xf32>
    %cst_50 = arith.constant -1.45315206 : f32
    %163 = vector.broadcast %cst_50 : f32 to vector<128x128xf32>
    %164 = arith.addf %162, %163 : vector<128x128xf32>
    %165 = arith.mulf %164, %160 : vector<128x128xf32>
    %cst_51 = arith.constant 1.42141378 : f32
    %166 = vector.broadcast %cst_51 : f32 to vector<128x128xf32>
    %167 = arith.addf %165, %166 : vector<128x128xf32>
    %168 = arith.mulf %167, %160 : vector<128x128xf32>
    %cst_52 = arith.constant -0.284496725 : f32
    %169 = vector.broadcast %cst_52 : f32 to vector<128x128xf32>
    %170 = arith.addf %168, %169 : vector<128x128xf32>
    %171 = arith.mulf %170, %160 : vector<128x128xf32>
    %cst_53 = arith.constant 0.254829586 : f32
    %172 = vector.broadcast %cst_53 : f32 to vector<128x128xf32>
    %173 = arith.addf %171, %172 : vector<128x128xf32>
    %174 = arith.mulf %173, %160 : vector<128x128xf32>
    %cst_54 = arith.constant 0.000000e+00 : f32
    %175 = vector.broadcast %cst_54 : f32 to vector<128x128xf32>
    %176 = arith.subf %175, %151 : vector<128x128xf32>
    %177 = arith.mulf %176, %151 : vector<128x128xf32>
    %178 = math.exp %177 : vector<128x128xf32>
    %179 = arith.mulf %174, %178 : vector<128x128xf32>
    %cst_55 = arith.constant 1.000000e+00 : f32
    %180 = vector.broadcast %cst_55 : f32 to vector<128x128xf32>
    %181 = arith.subf %180, %179 : vector<128x128xf32>
    %182 = arith.mulf %150, %181 : vector<128x128xf32>
    %cst_56 = arith.constant 1.000000e+00 : f32
    %183 = vector.broadcast %cst_56 : f32 to vector<128x128xf32>
    %184 = arith.addf %183, %182 : vector<128x128xf32>
    %185 = arith.mulf %143, %184 : vector<128x128xf32>
    %186 = arith.truncf %185 : vector<128x128xf32> to vector<128x128xbf16>
    %c0_57 = arith.constant 0 : index
    %c0_58 = arith.constant 0 : index
    %187 = vector.load %arg8[%c0_57, %c0_58] : memref<128x32xbf16, #tpu.memory_space<vmem>>, vector<128x32xbf16>
    %cst_59 = arith.constant dense<0.000000e+00> : vector<128x32xf32>
    %188 = tpu.matmul %186, %187, %cst_59 {dimension_numbers = #tpu.dot_dimension_numbers<[1], [0], [0], [1], [0, 0, 1, 1], [], []>} : vector<128x128xbf16>, vector<128x32xbf16>, vector<128x32xf32> -> vector<128x32xf32>
    %c0_60 = arith.constant 0 : index
    %c0_61 = arith.constant 0 : index
    %189 = vector.load %arg9[%c0_60, %c0_61] : memref<1x32xf32, #tpu.memory_space<vmem>>, vector<1x32xf32>
    %190 = vector.broadcast %189 : vector<1x32xf32> to vector<128x32xf32>
    %191 = arith.addf %188, %190 : vector<128x32xf32>
    %c0_62 = arith.constant 0 : index
    %c0_63 = arith.constant 0 : index
    %192 = vector.load %arg10[%c0_62, %c0_63] : memref<128x32xf32, #tpu.memory_space<vmem>>, vector<128x32xf32>
    tpu.vector_store %arg10[%c0_62, %c0_63], %191 {strides = array<i32>} : memref<128x32xf32, #tpu.memory_space<vmem>>, vector<128x32xf32>,
    return
  }
  func.func @transform_0(%arg0: i32) -> (i32, i32) {
    %c0_i32 = arith.constant 0 : i32
    %c0_i32_0 = arith.constant 0 : i32
    return %arg0, %c0_i32 : i32, i32
  }
  func.func @transform_1(%arg0: i32) -> (i32, i32) {
    %c0_i32 = arith.constant 0 : i32
    %c0_i32_0 = arith.constant 0 : i32
    %c0_i32_1 = arith.constant 0 : i32
    return %c0_i32, %c0_i32_0 : i32, i32
  }
  func.func @transform_2(%arg0: i32) -> (i32, i32) {
    %c0_i32 = arith.constant 0 : i32
    %c0_i32_0 = arith.constant 0 : i32
    %c0_i32_1 = arith.constant 0 : i32
    return %c0_i32, %c0_i32_0 : i32, i32
  }
  func.func @transform_3(%arg0: i32) -> (i32, i32) {
    %c0_i32 = arith.constant 0 : i32
    %c0_i32_0 = arith.constant 0 : i32
    %c0_i32_1 = arith.constant 0 : i32
    return %c0_i32, %c0_i32_0 : i32, i32
  }
  func.func @transform_4(%arg0: i32) -> (i32, i32) {
    %c0_i32 = arith.constant 0 : i32
    %c0_i32_0 = arith.constant 0 : i32
    %c0_i32_1 = arith.constant 0 : i32
    return %c0_i32, %c0_i32_0 : i32, i32
  }
  func.func @transform_5(%arg0: i32) -> (i32, i32) {
    %c0_i32 = arith.constant 0 : i32
    %c0_i32_0 = arith.constant 0 : i32
    %c0_i32_1 = arith.constant 0 : i32
    return %c0_i32, %c0_i32_0 : i32, i32
  }
  func.func @transform_6(%arg0: i32) -> (i32, i32) {
    %c0_i32 = arith.constant 0 : i32
    %c0_i32_0 = arith.constant 0 : i32
    %c0_i32_1 = arith.constant 0 : i32
    return %c0_i32, %c0_i32_0 : i32, i32
  }
  func.func @transform_7(%arg0: i32) -> (i32, i32) {
    %c0_i32 = arith.constant 0 : i32
    %c0_i32_0 = arith.constant 0 : i32
    %c0_i32_1 = arith.constant 0 : i32
    return %c0_i32, %c0_i32_0 : i32, i32
  }
  func.func @transform_8(%arg0: i32) -> (i32, i32) {
    %c0_i32 = arith.constant 0 : i32
    %c0_i32_0 = arith.constant 0 : i32
    %c0_i32_1 = arith.constant 0 : i32
    return %c0_i32, %c0_i32_0 : i32, i32
  }
  func.func @transform_9(%arg0: i32) -> (i32, i32) {
    %c0_i32 = arith.constant 0 : i32
    %c0_i32_0 = arith.constant 0 : i32
    return %arg0, %c0_i32 : i32, i32
  }
}

</mosaic_0001>

<llo_original>
// kernel: tpu_custom_call.1
$region0: #{tpu_custom_call.1}
  #allocation0 [shape = 'u32[]', space=smem, size = 0x4, offset = 0x4, fixed_abs, tag = 'smem constant byte address 0x4 - core index']
  #allocation1 [shape = 'u32[144,128]{1,0:T(1,128)}', space=vmem, size = 0x12000, scoped, tag = 'internal scratch']
  %s0 = inlined_call_operand.vmem [shape: f32[128,32], index: 0, kind: input, shape index: {}]
  %s1 = inlined_call_operand.vmem [shape: s32[128,1], index: 1, kind: input, shape index: {}]
  %s2 = inlined_call_operand.vmem [shape: s32[128,1], index: 2, kind: input, shape index: {}]
  %s3 = inlined_call_operand.vmem [shape: bf16[32,128], index: 3, kind: input, shape index: {}]
  %s4 = inlined_call_operand.vmem [shape: f32[1,128], index: 4, kind: input, shape index: {}]
  %s5 = inlined_call_operand.vmem [shape: f32[9,128], index: 5, kind: input, shape index: {}]
  %s6 = inlined_call_operand.vmem [shape: f32[1,128], index: 6, kind: input, shape index: {}]
  %s7 = inlined_call_operand.vmem [shape: bf16[128,32], index: 7, kind: input, shape index: {}]
  %s8 = inlined_call_operand.vmem [shape: f32[1,32], index: 8, kind: input, shape index: {}]
  %s9 = inlined_call_operand.vmem [shape: f32[128,32], index: 9, kind: output, shape index: {}]
  %s10 = sld [smem:[#allocation0]]
  $region46: #{tpu_custom_call.1} parent=0
    _
  %s12 = ssub.s32 1, %s10
  %s13 = scalar_select 0, %s12, %s10
  // Predicated region
  $region2: #{tpu_custom_call.1} parent=0 // pred_check
    _
  $region3: #{tpu_custom_call.1} parent=0 // pred_check_branch
    %15 = sbr.rel (0) target = $region5
  $region4: #{tpu_custom_call.1} parent=0 // pred_region
    _
  $region5: #{tpu_custom_call.1} parent=0 // pred_fallthru
    _
  // Predicated region
  $region6: #{tpu_custom_call.1} parent=0 // pred_check
    _
  $region7: #{tpu_custom_call.1} parent=0 // pred_check_branch
    %17 = sbr.rel (0) target = $region9
  $region8: #{tpu_custom_call.1} parent=0 // pred_region
    _
  $region9: #{tpu_custom_call.1} parent=0 // pred_fallthru
    _
  // Predicated region
  $region10: #{tpu_custom_call.1} parent=0 // pred_check
    _
  $region11: #{tpu_custom_call.1} parent=0 // pred_check_branch
    %19 = sbr.rel (0) target = $region13
  $region12: #{tpu_custom_call.1} parent=0 // pred_region
    _
  $region13: #{tpu_custom_call.1} parent=0 // pred_fallthru
    _
  // Predicated region
  $region14: #{tpu_custom_call.1} parent=0 // pred_check
    _
  $region15: #{tpu_custom_call.1} parent=0 // pred_check_branch
    %21 = sbr.rel (0) target = $region17
  $region16: #{tpu_custom_call.1} parent=0 // pred_region
    _
  $region17: #{tpu_custom_call.1} parent=0 // pred_fallthru
    _
  // Predicated region
  $region18: #{tpu_custom_call.1} parent=0 // pred_check
    _
  $region19: #{tpu_custom_call.1} parent=0 // pred_check_branch
    %23 = sbr.rel (0) target = $region21
  $region20: #{tpu_custom_call.1} parent=0 // pred_region
    _
  $region21: #{tpu_custom_call.1} parent=0 // pred_fallthru
    _
  // Predicated region
  $region22: #{tpu_custom_call.1} parent=0 // pred_check
    _
  $region23: #{tpu_custom_call.1} parent=0 // pred_check_branch
    %25 = sbr.rel (0) target = $region25
  $region24: #{tpu_custom_call.1} parent=0 // pred_region
    _
  $region25: #{tpu_custom_call.1} parent=0 // pred_fallthru
    _
  // Predicated region
  $region26: #{tpu_custom_call.1} parent=0 // pred_check
    _
  $region27: #{tpu_custom_call.1} parent=0 // pred_check_branch
    %27 = sbr.rel (0) target = $region29
  $region28: #{tpu_custom_call.1} parent=0 // pred_region
    _
  $region29: #{tpu_custom_call.1} parent=0 // pred_fallthru
    _
  // Predicated region
  $region30: #{tpu_custom_call.1} parent=0 // pred_check
    _
  $region31: #{tpu_custom_call.1} parent=0 // pred_check_branch
    %29 = sbr.rel (0) target = $region33
  $region32: #{tpu_custom_call.1} parent=0 // pred_region
    _
  $region33: #{tpu_custom_call.1} parent=0 // pred_fallthru
    _
  // Predicated region
  $region34: #{tpu_custom_call.1} parent=0 // pred_check
    _
  $region35: #{tpu_custom_call.1} parent=0 // pred_check_branch
    %31 = sbr.rel (0) target = $region37
  $region36: #{tpu_custom_call.1} parent=0 // pred_region
    _
  $region37: #{tpu_custom_call.1} parent=0 // pred_fallthru
    _
  %v33 = vld [vmem:[%s0] sm:$0xff]
  %v34 = vld [vmem:[%s0 + $0x8] sm:$0xff]
  %v35 = vld [vmem:[%s0 + $0x10] sm:$0xff]
  %v36 = vld [vmem:[%s0 + $0x18] sm:$0xff]
  %v37 = vld [vmem:[%s0 + $0x20] sm:$0xff]
  %v38 = vld [vmem:[%s0 + $0x28] sm:$0xff]
  %v39 = vld [vmem:[%s0 + $0x30] sm:$0xff]
  %v40 = vld [vmem:[%s0 + $0x38] sm:$0xff]
  %v41 = vld [vmem:[%s0 + $0x40] sm:$0xff]
  %v42 = vld [vmem:[%s0 + $0x48] sm:$0xff]
  %v43 = vld [vmem:[%s0 + $0x50] sm:$0xff]
  %v44 = vld [vmem:[%s0 + $0x58] sm:$0xff]
  %v45 = vld [vmem:[%s0 + $0x60] sm:$0xff]
  %v46 = vld [vmem:[%s0 + $0x68] sm:$0xff]
  %v47 = vld [vmem:[%s0 + $0x70] sm:$0xff]
  %v48 = vld [vmem:[%s0 + $0x78] sm:$0xff]
  %v49 = vpack.c.bf16 %v34, %v33
  %v50 = vpack.c.bf16 %v36, %v35
  %v51 = vpack.c.bf16 %v38, %v37
  %v52 = vpack.c.bf16 %v40, %v39
  %v53 = vpack.c.bf16 %v42, %v41
  %v54 = vpack.c.bf16 %v44, %v43
  %v55 = vpack.c.bf16 %v46, %v45
  %v56 = vpack.c.bf16 %v48, %v47
  %v57 = vld [vmem:[%s3] sm:$0xf]
  %v58 = vld [vmem:[%s3 + $0x4] sm:$0xf]
  %v59 = vld [vmem:[%s3 + $0x8] sm:$0xf]
  %v60 = vld [vmem:[%s3 + $0xc] sm:$0xf]
  %v61 = vld [vmem:[%s4] sm:$0x1]
  %v63 = vlaneseq
  %v64 = vshrl.u32 %v63, 7
  %v65 = vsub.s32 0, %v64
  %v66 = vrot.slane %v61, %v65
  %v72 = vunpack.c.l.b16 %v57
  %v73 = vunpack.c.l.b16 %v58
  %v74 = vunpack.c.l.b16 %v59
  %v75 = vunpack.c.l.b16 %v60
  %v76 = vpack.c.b16 %v73, %v72
  %v77 = vpack.c.b16 %v75, %v74
  %vm80 = vcmask 261120
  %v82 = vsel %vm80, %v49, 0
  %v85 = vsel %vm80, %v50, 0
  %v88 = vsel %vm80, %v51, 0
  %v91 = vsel %vm80, %v52, 0
  %v94 = vsel %vm80, %v53, 0
  %v97 = vsel %vm80, %v54, 0
  %v100 = vsel %vm80, %v55, 0
  %v103 = vsel %vm80, %v56, 0
  %105 = vmatprep.subr.bf16.mxu0 0
  %106 = vmatpush1.bf16.msra.mxu0 %v76
  %107 = vmatprep.subr.bf16.mxu0 0
  %108 = vmatpush1.bf16.msra.mxu0 %v77
  %109 = vmatprep.subr.bf16.mxu0 0
  %110 = vmatpush1.bf16.msra.mxu0 0
  %111 = vmatprep.subr.bf16.mxu0 0
  %112 = vmatpush1.bf16.msra.mxu0 0
  %113 = vmatprep.subr.bf16.mxu0 0
  %114 = vmatpush1.bf16.msra.mxu0 0
  %115 = vmatprep.subr.bf16.mxu0 0
  %116 = vmatpush1.bf16.msra.mxu0 0
  %117 = vmatprep.subr.bf16.mxu0 0
  %118 = vmatpush1.bf16.msra.mxu0 0
  %119 = vmatprep.subr.bf16.mxu0 0
  %120 = vmatpush1.bf16.msra.mxu0 0
  %121 = vmatprep.subr.bf16.mxu0 0
  %122 = vmatpush1.bf16.msra.mxu0 0
  %123 = vmatprep.subr.bf16.mxu0 0
  %124 = vmatpush1.bf16.msra.mxu0 0
  %125 = vmatprep.subr.bf16.mxu0 0
  %126 = vmatpush1.bf16.msra.mxu0 0
  %127 = vmatprep.subr.bf16.mxu0 0
  %128 = vmatpush1.bf16.msra.mxu0 0
  %129 = vmatprep.subr.bf16.mxu0 0
  %130 = vmatpush1.bf16.msra.mxu0 0
  %131 = vmatprep.subr.bf16.mxu0 0
  %132 = vmatpush1.bf16.msra.mxu0 0
  %133 = vmatprep.subr.bf16.mxu0 0
  %134 = vmatpush1.bf16.msra.mxu0 0
  %135 = vmatprep.subr.bf16.mxu0 0
  %136 = vmatpush1.bf16.msra.mxu0 0
  %137 = vmatprep.mubr.bf16.mxu0 0
  %138 = vmatmul.mubr.bf16.gmra.mrb[0].mxu0 %v82
  %v139 = vpop.f32.mrb[0].mxu0
  %v140 = vadd.f32 %v66, %v139
  %v141 = vpop.f32.mrb[0].mxu0
  %v142 = vpop.f32.mrb[0].mxu0
  %v143 = vadd.f32 %v66, %v142
  %v144 = vpop.f32.mrb[0].mxu0
  %145 = vmatprep.mubr.bf16.mxu0 0
  %146 = vmatmul.mubr.bf16.gmra.mrb[0].mxu0 %v85
  %v147 = vpop.f32.mrb[0].mxu0
  %v148 = vadd.f32 %v66, %v147
  %v149 = vpop.f32.mrb[0].mxu0
  %v150 = vpop.f32.mrb[0].mxu0
  %v151 = vadd.f32 %v66, %v150
  %v152 = vpop.f32.mrb[0].mxu0
  %153 = vmatprep.mubr.bf16.mxu0 0
  %154 = vmatmul.mubr.bf16.gmra.mrb[0].mxu0 %v88
  %v155 = vpop.f32.mrb[0].mxu0
  %v156 = vadd.f32 %v66, %v155
  %v157 = vpop.f32.mrb[0].mxu0
  %v158 = vpop.f32.mrb[0].mxu0
  %v159 = vadd.f32 %v66, %v158
  %v160 = vpop.f32.mrb[0].mxu0
  %161 = vmatprep.mubr.bf16.mxu0 0
  %162 = vmatmul.mubr.bf16.gmra.mrb[0].mxu0 %v91
  %v163 = vpop.f32.mrb[0].mxu0
  %v164 = vadd.f32 %v66, %v163
  %v165 = vpop.f32.mrb[0].mxu0
  %v166 = vpop.f32.mrb[0].mxu0
  %v167 = vadd.f32 %v66, %v166
  %v168 = vpop.f32.mrb[0].mxu0
  %169 = vmatprep.mubr.bf16.mxu0 0
  %170 = vmatmul.mubr.bf16.gmra.mrb[0].mxu0 %v94
  %v171 = vpop.f32.mrb[0].mxu0
  %v172 = vadd.f32 %v66, %v171
  %v173 = vpop.f32.mrb[0].mxu0
  %v174 = vpop.f32.mrb[0].mxu0
  %v175 = vadd.f32 %v66, %v174
  %v176 = vpop.f32.mrb[0].mxu0
  %177 = vmatprep.mubr.bf16.mxu0 0
  %178 = vmatmul.mubr.bf16.gmra.mrb[0].mxu0 %v97
  %v179 = vpop.f32.mrb[0].mxu0
  %v180 = vadd.f32 %v66, %v179
  %v181 = vpop.f32.mrb[0].mxu0
  %v182 = vpop.f32.mrb[0].mxu0
  %v183 = vadd.f32 %v66, %v182
  %v184 = vpop.f32.mrb[0].mxu0
  %185 = vmatprep.mubr.bf16.mxu0 0
  %186 = vmatmul.mubr.bf16.gmra.mrb[0].mxu0 %v100
  %v187 = vpop.f32.mrb[0].mxu0
  %v188 = vadd.f32 %v66, %v187
  %v189 = vpop.f32.mrb[0].mxu0
  %v190 = vpop.f32.mrb[0].mxu0
  %v191 = vadd.f32 %v66, %v190
  %v192 = vpop.f32.mrb[0].mxu0
  %193 = vmatprep.mubr.bf16.mxu0 0
  %194 = vmatmul.mubr.bf16.gmra.mrb[0].mxu0 %v103
  %v195 = vpop.f32.mrb[0].mxu0
  %v196 = vadd.f32 %v66, %v195
  %v197 = vpop.f32.mrb[0].mxu0
  %v198 = vpop.f32.mrb[0].mxu0
  %v199 = vadd.f32 %v66, %v198
  %v200 = vpop.f32.mrb[0].mxu0
  %201 = vdwg.mxu0
  %v202 = vmul.f32 %v140, 0.5
  %v203 = vmul.f32 %v143, 0.5
  %v204 = vmul.f32 %v148, 0.5
  %v205 = vmul.f32 %v151, 0.5
  %v206 = vmul.f32 %v156, 0.5
  %v207 = vmul.f32 %v159, 0.5
  %v208 = vmul.f32 %v164, 0.5
  %v209 = vmul.f32 %v167, 0.5
  %v210 = vmul.f32 %v172, 0.5
  %v211 = vmul.f32 %v175, 0.5
  %v212 = vmul.f32 %v180, 0.5
  %v213 = vmul.f32 %v183, 0.5
  %v214 = vmul.f32 %v188, 0.5
  %v215 = vmul.f32 %v191, 0.5
  %v216 = vmul.f32 %v196, 0.5
  %v217 = vmul.f32 %v199, 0.5
  %v218 = vmul.f32 %v140, 0.70710677
  %v219 = vmul.f32 %v143, 0.70710677
  %v220 = vmul.f32 %v148, 0.70710677
  %v221 = vmul.f32 %v151, 0.70710677
  %v222 = vmul.f32 %v156, 0.70710677
  %v223 = vmul.f32 %v159, 0.70710677
  %v224 = vmul.f32 %v164, 0.70710677
  %v225 = vmul.f32 %v167, 0.70710677
  %v226 = vmul.f32 %v172, 0.70710677
  %v227 = vmul.f32 %v175, 0.70710677
  %v228 = vmul.f32 %v180, 0.70710677
  %v229 = vmul.f32 %v183, 0.70710677
  %v230 = vmul.f32 %v188, 0.70710677
  %v231 = vmul.f32 %v191, 0.70710677
  %v232 = vmul.f32 %v196, 0.70710677
  %v233 = vmul.f32 %v199, 0.70710677
  %vm234 = vcmp.lt.f32.partialorder %v218, 0.0
  %vm235 = vcmp.lt.f32.partialorder %v219, 0.0
  %vm236 = vcmp.lt.f32.partialorder %v220, 0.0
  %vm237 = vcmp.lt.f32.partialorder %v221, 0.0
  %vm238 = vcmp.lt.f32.partialorder %v222, 0.0
  %vm239 = vcmp.lt.f32.partialorder %v223, 0.0
  %vm240 = vcmp.lt.f32.partialorder %v224, 0.0
  %vm241 = vcmp.lt.f32.partialorder %v225, 0.0
  %vm242 = vcmp.lt.f32.partialorder %v226, 0.0
  %vm243 = vcmp.lt.f32.partialorder %v227, 0.0
  %vm244 = vcmp.lt.f32.partialorder %v228, 0.0
  %vm245 = vcmp.lt.f32.partialorder %v229, 0.0
  %vm246 = vcmp.lt.f32.partialorder %v230, 0.0
  %vm247 = vcmp.lt.f32.partialorder %v231, 0.0
  %vm248 = vcmp.lt.f32.partialorder %v232, 0.0
  %vm249 = vcmp.lt.f32.partialorder %v233, 0.0
  %v250 = vsel %vm234, -1.0, 1.0
  %v251 = vsel %vm235, -1.0, 1.0
  %v252 = vsel %vm236, -1.0, 1.0
  %v253 = vsel %vm237, -1.0, 1.0
  %v254 = vsel %vm238, -1.0, 1.0
  %v255 = vsel %vm239, -1.0, 1.0
  %v256 = vsel %vm240, -1.0, 1.0
  %v257 = vsel %vm241, -1.0, 1.0
  %v258 = vsel %vm242, -1.0, 1.0
  %v259 = vsel %vm243, -1.0, 1.0
  %v260 = vsel %vm244, -1.0, 1.0
  %v261 = vsel %vm245, -1.0, 1.0
  %v262 = vsel %vm246, -1.0, 1.0
  %v263 = vsel %vm247, -1.0, 1.0
  %v264 = vsel %vm248, -1.0, 1.0
  %v265 = vsel %vm249, -1.0, 1.0
  %v266 = vand.u32 2147483647, %v218
  %v267 = vand.u32 2147483647, %v219
  %v268 = vand.u32 2147483647, %v220
  %v269 = vand.u32 2147483647, %v221
  %v270 = vand.u32 2147483647, %v222
  %v271 = vand.u32 2147483647, %v223
  %v272 = vand.u32 2147483647, %v224
  %v273 = vand.u32 2147483647, %v225
  %v274 = vand.u32 2147483647, %v226
  %v275 = vand.u32 2147483647, %v227
  %v276 = vand.u32 2147483647, %v228
  %v277 = vand.u32 2147483647, %v229
  %v278 = vand.u32 2147483647, %v230
  %v279 = vand.u32 2147483647, %v231
  %v280 = vand.u32 2147483647, %v232
  %v281 = vand.u32 2147483647, %v233
  %v282 = vmul.f32 %v266, 0.3275911
  %v283 = vmul.f32 %v267, 0.3275911
  %v284 = vmul.f32 %v268, 0.3275911
  %v285 = vmul.f32 %v269, 0.3275911
  %v286 = vmul.f32 %v270, 0.3275911
  %v287 = vmul.f32 %v271, 0.3275911
  %v288 = vmul.f32 %v272, 0.3275911
  %v289 = vmul.f32 %v273, 0.3275911
  %v290 = vmul.f32 %v274, 0.3275911
  %v291 = vmul.f32 %v275, 0.3275911
  %v292 = vmul.f32 %v276, 0.3275911
  %v293 = vmul.f32 %v277, 0.3275911
  %v294 = vmul.f32 %v278, 0.3275911
  %v295 = vmul.f32 %v279, 0.3275911
  %v296 = vmul.f32 %v280, 0.3275911
  %v297 = vmul.f32 %v281, 0.3275911
  %v298 = vadd.f32 %v282, 1.0
  %v299 = vadd.f32 %v283, 1.0
  %v300 = vadd.f32 %v284, 1.0
  %v301 = vadd.f32 %v285, 1.0
  %v302 = vadd.f32 %v286, 1.0
  %v303 = vadd.f32 %v287, 1.0
  %v304 = vadd.f32 %v288, 1.0
  %v305 = vadd.f32 %v289, 1.0
  %v306 = vadd.f32 %v290, 1.0
  %v307 = vadd.f32 %v291, 1.0
  %v308 = vadd.f32 %v292, 1.0
  %v309 = vadd.f32 %v293, 1.0
  %v310 = vadd.f32 %v294, 1.0
  %v311 = vadd.f32 %v295, 1.0
  %v312 = vadd.f32 %v296, 1.0
  %v313 = vadd.f32 %v297, 1.0
  %v314 = vrcp.pop %v298
  %v315 = vrcp.pop %v299
  %v316 = vrcp.pop %v300
  %v317 = vrcp.pop %v301
  %v318 = vrcp.pop %v302
  %v319 = vrcp.pop %v303
  %v320 = vrcp.pop %v304
  %v321 = vrcp.pop %v305
  %v322 = vrcp.pop %v306
  %v323 = vrcp.pop %v307
  %v324 = vrcp.pop %v308
  %v325 = vrcp.pop %v309
  %v326 = vrcp.pop %v310
  %v327 = vrcp.pop %v311
  %v328 = vrcp.pop %v312
  %v329 = vrcp.pop %v313
  %v330 = vmul.f32 %v298, %v314
  %v331 = vmul.f32 %v299, %v315
  %v332 = vmul.f32 %v300, %v316
  %v333 = vmul.f32 %v301, %v317
  %v334 = vmul.f32 %v302, %v318
  %v335 = vmul.f32 %v303, %v319
  %v336 = vmul.f32 %v304, %v320
  %v337 = vmul.f32 %v305, %v321
  %v338 = vmul.f32 %v306, %v322
  %v339 = vmul.f32 %v307, %v323
  %v340 = vmul.f32 %v308, %v324
  %v341 = vmul.f32 %v309, %v325
  %v342 = vmul.f32 %v310, %v326
  %v343 = vmul.f32 %v311, %v327
  %v344 = vmul.f32 %v312, %v328
  %v345 = vmul.f32 %v313, %v329
  %v346 = vsub.f32 2.0, %v330
  %v347 = vsub.f32 2.0, %v331
  %v348 = vsub.f32 2.0, %v332
  %v349 = vsub.f32 2.0, %v333
  %v350 = vsub.f32 2.0, %v334
  %v351 = vsub.f32 2.0, %v335
  %v352 = vsub.f32 2.0, %v336
  %v353 = vsub.f32 2.0, %v337
  %v354 = vsub.f32 2.0, %v338
  %v355 = vsub.f32 2.0, %v339
  %v356 = vsub.f32 2.0, %v340
  %v357 = vsub.f32 2.0, %v341
  %v358 = vsub.f32 2.0, %v342
  %v359 = vsub.f32 2.0, %v343
  %v360 = vsub.f32 2.0, %v344
  %v361 = vsub.f32 2.0, %v345
  %v362 = vmul.f32 %v314, %v346
  %v363 = vmul.f32 %v315, %v347
  %v364 = vmul.f32 %v316, %v348
  %v365 = vmul.f32 %v317, %v349
  %v366 = vmul.f32 %v318, %v350
  %v367 = vmul.f32 %v319, %v351
  %v368 = vmul.f32 %v320, %v352
  %v369 = vmul.f32 %v321, %v353
  %v370 = vmul.f32 %v322, %v354
  %v371 = vmul.f32 %v323, %v355
  %v372 = vmul.f32 %v324, %v356
  %v373 = vmul.f32 %v325, %v357
  %v374 = vmul.f32 %v326, %v358
  %v375 = vmul.f32 %v327, %v359
  %v376 = vmul.f32 %v328, %v360
  %v377 = vmul.f32 %v329, %v361
  %v378 = vmul.f32 %v362, 1.0614054
  %v379 = vmul.f32 %v363, 1.0614054
  %v380 = vmul.f32 %v364, 1.0614054
  %v381 = vmul.f32 %v365, 1.0614054
  %v382 = vmul.f32 %v366, 1.0614054
  %v383 = vmul.f32 %v367, 1.0614054
  %v384 = vmul.f32 %v368, 1.0614054
  %v385 = vmul.f32 %v369, 1.0614054
  %v386 = vmul.f32 %v370, 1.0614054
  %v387 = vmul.f32 %v371, 1.0614054
  %v388 = vmul.f32 %v372, 1.0614054
  %v389 = vmul.f32 %v373, 1.0614054
  %v390 = vmul.f32 %v374, 1.0614054
  %v391 = vmul.f32 %v375, 1.0614054
  %v392 = vmul.f32 %v376, 1.0614054
  %v393 = vmul.f32 %v377, 1.0614054
  %v394 = vadd.f32 %v378, -1.4531521
  %v395 = vadd.f32 %v379, -1.4531521
  %v396 = vadd.f32 %v380, -1.4531521
  %v397 = vadd.f32 %v381, -1.4531521
  %v398 = vadd.f32 %v382, -1.4531521
  %v399 = vadd.f32 %v383, -1.4531521
  %v400 = vadd.f32 %v384, -1.4531521
  %v401 = vadd.f32 %v385, -1.4531521
  %v402 = vadd.f32 %v386, -1.4531521
  %v403 = vadd.f32 %v387, -1.4531521
  %v404 = vadd.f32 %v388, -1.4531521
  %v405 = vadd.f32 %v389, -1.4531521
  %v406 = vadd.f32 %v390, -1.4531521
  %v407 = vadd.f32 %v391, -1.4531521
  %v408 = vadd.f32 %v392, -1.4531521
  %v409 = vadd.f32 %v393, -1.4531521
  %v410 = vmul.f32 %v394, %v362
  %v411 = vmul.f32 %v395, %v363
  %v412 = vmul.f32 %v396, %v364
  %v413 = vmul.f32 %v397, %v365
  %v414 = vmul.f32 %v398, %v366
  %v415 = vmul.f32 %v399, %v367
  %v416 = vmul.f32 %v400, %v368
  %v417 = vmul.f32 %v401, %v369
  %v418 = vmul.f32 %v402, %v370
  %v419 = vmul.f32 %v403, %v371
  %v420 = vmul.f32 %v404, %v372
  %v421 = vmul.f32 %v405, %v373
  %v422 = vmul.f32 %v406, %v374
  %v423 = vmul.f32 %v407, %v375
  %v424 = vmul.f32 %v408, %v376
  %v425 = vmul.f32 %v409, %v377
  %v426 = vadd.f32 %v410, 1.4214138
  %v427 = vadd.f32 %v411, 1.4214138
  %v428 = vadd.f32 %v412, 1.4214138
  %v429 = vadd.f32 %v413, 1.4214138
  %v430 = vadd.f32 %v414, 1.4214138
  %v431 = vadd.f32 %v415, 1.4214138
  %v432 = vadd.f32 %v416, 1.4214138
  %v433 = vadd.f32 %v417, 1.4214138
  %v434 = vadd.f32 %v418, 1.4214138
  %v435 = vadd.f32 %v419, 1.4214138
  %v436 = vadd.f32 %v420, 1.4214138
  %v437 = vadd.f32 %v421, 1.4214138
  %v438 = vadd.f32 %v422, 1.4214138
  %v439 = vadd.f32 %v423, 1.4214138
  %v440 = vadd.f32 %v424, 1.4214138
  %v441 = vadd.f32 %v425, 1.4214138
  %v442 = vmul.f32 %v426, %v362
  %v443 = vmul.f32 %v427, %v363
  %v444 = vmul.f32 %v428, %v364
  %v445 = vmul.f32 %v429, %v365
  %v446 = vmul.f32 %v430, %v366
  %v447 = vmul.f32 %v431, %v367
  %v448 = vmul.f32 %v432, %v368
  %v449 = vmul.f32 %v433, %v369
  %v450 = vmul.f32 %v434, %v370
  %v451 = vmul.f32 %v435, %v371
  %v452 = vmul.f32 %v436, %v372
  %v453 = vmul.f32 %v437, %v373
  %v454 = vmul.f32 %v438, %v374
  %v455 = vmul.f32 %v439, %v375
  %v456 = vmul.f32 %v440, %v376
  %v457 = vmul.f32 %v441, %v377
  %v458 = vadd.f32 %v442, -0.28449672
  %v459 = vadd.f32 %v443, -0.28449672
  %v460 = vadd.f32 %v444, -0.28449672
  %v461 = vadd.f32 %v445, -0.28449672
  %v462 = vadd.f32 %v446, -0.28449672
  %v463 = vadd.f32 %v447, -0.28449672
  %v464 = vadd.f32 %v448, -0.28449672
  %v465 = vadd.f32 %v449, -0.28449672
  %v466 = vadd.f32 %v450, -0.28449672
  %v467 = vadd.f32 %v451, -0.28449672
  %v468 = vadd.f32 %v452, -0.28449672
  %v469 = vadd.f32 %v453, -0.28449672
  %v470 = vadd.f32 %v454, -0.28449672
  %v471 = vadd.f32 %v455, -0.28449672
  %v472 = vadd.f32 %v456, -0.28449672
  %v473 = vadd.f32 %v457, -0.28449672
  %v474 = vmul.f32 %v458, %v362
  %v475 = vmul.f32 %v459, %v363
  %v476 = vmul.f32 %v460, %v364
  %v477 = vmul.f32 %v461, %v365
  %v478 = vmul.f32 %v462, %v366
  %v479 = vmul.f32 %v463, %v367
  %v480 = vmul.f32 %v464, %v368
  %v481 = vmul.f32 %v465, %v369
  %v482 = vmul.f32 %v466, %v370
  %v483 = vmul.f32 %v467, %v371
  %v484 = vmul.f32 %v468, %v372
  %v485 = vmul.f32 %v469, %v373
  %v486 = vmul.f32 %v470, %v374
  %v487 = vmul.f32 %v471, %v375
  %v488 = vmul.f32 %v472, %v376
  %v489 = vmul.f32 %v473, %v377
  %v490 = vadd.f32 %v474, 0.2548296
  %v491 = vadd.f32 %v475, 0.2548296
  %v492 = vadd.f32 %v476, 0.2548296
  %v493 = vadd.f32 %v477, 0.2548296
  %v494 = vadd.f32 %v478, 0.2548296
  %v495 = vadd.f32 %v479, 0.2548296
  %v496 = vadd.f32 %v480, 0.2548296
  %v497 = vadd.f32 %v481, 0.2548296
  %v498 = vadd.f32 %v482, 0.2548296
  %v499 = vadd.f32 %v483, 0.2548296
  %v500 = vadd.f32 %v484, 0.2548296
  %v501 = vadd.f32 %v485, 0.2548296
  %v502 = vadd.f32 %v486, 0.2548296
  %v503 = vadd.f32 %v487, 0.2548296
  %v504 = vadd.f32 %v488, 0.2548296
  %v505 = vadd.f32 %v489, 0.2548296
  %v506 = vmul.f32 %v490, %v362
  %v507 = vmul.f32 %v491, %v363
  %v508 = vmul.f32 %v492, %v364
  %v509 = vmul.f32 %v493, %v365
  %v510 = vmul.f32 %v494, %v366
  %v511 = vmul.f32 %v495, %v367
  %v512 = vmul.f32 %v496, %v368
  %v513 = vmul.f32 %v497, %v369
  %v514 = vmul.f32 %v498, %v370
  %v515 = vmul.f32 %v499, %v371
  %v516 = vmul.f32 %v500, %v372
  %v517 = vmul.f32 %v501, %v373
  %v518 = vmul.f32 %v502, %v374
  %v519 = vmul.f32 %v503, %v375
  %v520 = vmul.f32 %v504, %v376
  %v521 = vmul.f32 %v505, %v377
  %v522 = vsub.f32 0.0, %v266
  %v523 = vsub.f32 0.0, %v267
  %v524 = vsub.f32 0.0, %v268
  %v525 = vsub.f32 0.0, %v269
  %v526 = vsub.f32 0.0, %v270
  %v527 = vsub.f32 0.0, %v271
  %v528 = vsub.f32 0.0, %v272
  %v529 = vsub.f32 0.0, %v273
  %v530 = vsub.f32 0.0, %v274
  %v531 = vsub.f32 0.0, %v275
  %v532 = vsub.f32 0.0, %v276
  %v533 = vsub.f32 0.0, %v277
  %v534 = vsub.f32 0.0, %v278
  %v535 = vsub.f32 0.0, %v279
  %v536 = vsub.f32 0.0, %v280
  %v537 = vsub.f32 0.0, %v281
  %v538 = vmul.f32 %v522, %v266
  %v539 = vmul.f32 %v523, %v267
  %v540 = vmul.f32 %v524, %v268
  %v541 = vmul.f32 %v525, %v269
  %v542 = vmul.f32 %v526, %v270
  %v543 = vmul.f32 %v527, %v271
  %v544 = vmul.f32 %v528, %v272
  %v545 = vmul.f32 %v529, %v273
  %v546 = vmul.f32 %v530, %v274
  %v547 = vmul.f32 %v531, %v275
  %v548 = vmul.f32 %v532, %v276
  %v549 = vmul.f32 %v533, %v277
  %v550 = vmul.f32 %v534, %v278
  %v551 = vmul.f32 %v535, %v279
  %v552 = vmul.f32 %v536, %v280
  %v553 = vmul.f32 %v537, %v281
  %v554 = vmul.f32 %v538, 1.442695
  %v555 = vpow.pop %v554
  %v556 = vmul.f32 %v539, 1.442695
  %v557 = vpow.pop %v556
  %v558 = vmul.f32 %v540, 1.442695
  %v559 = vpow.pop %v558
  %v560 = vmul.f32 %v541, 1.442695
  %v561 = vpow.pop %v560
  %v562 = vmul.f32 %v542, 1.442695
  %v563 = vpow.pop %v562
  %v564 = vmul.f32 %v543, 1.442695
  %v565 = vpow.pop %v564
  %v566 = vmul.f32 %v544, 1.442695
  %v567 = vpow.pop %v566
  %v568 = vmul.f32 %v545, 1.442695
  %v569 = vpow.pop %v568
  %v570 = vmul.f32 %v546, 1.442695
  %v571 = vpow.pop %v570
  %v572 = vmul.f32 %v547, 1.442695
  %v573 = vpow.pop %v572
  %v574 = vmul.f32 %v548, 1.442695
  %v575 = vpow.pop %v574
  %v576 = vmul.f32 %v549, 1.442695
  %v577 = vpow.pop %v576
  %v578 = vmul.f32 %v550, 1.442695
  %v579 = vpow.pop %v578
  %v580 = vmul.f32 %v551, 1.442695
  %v581 = vpow.pop %v580
  %v582 = vmul.f32 %v552, 1.442695
  %v583 = vpow.pop %v582
  %v584 = vmul.f32 %v553, 1.442695
  %v585 = vpow.pop %v584
  %v586 = vmul.f32 %v506, %v555
  %v587 = vmul.f32 %v507, %v557
  %v588 = vmul.f32 %v508, %v559
  %v589 = vmul.f32 %v509, %v561
  %v590 = vmul.f32 %v510, %v563
  %v591 = vmul.f32 %v511, %v565
  %v592 = vmul.f32 %v512, %v567
  %v593 = vmul.f32 %v513, %v569
  %v594 = vmul.f32 %v514, %v571
  %v595 = vmul.f32 %v515, %v573
  %v596 = vmul.f32 %v516, %v575
  %v597 = vmul.f32 %v517, %v577
  %v598 = vmul.f32 %v518, %v579
  %v599 = vmul.f32 %v519, %v581
  %v600 = vmul.f32 %v520, %v583
  %v601 = vmul.f32 %v521, %v585
  %v602 = vsub.f32 1.0, %v586
  %v603 = vsub.f32 1.0, %v587
  %v604 = vsub.f32 1.0, %v588
  %v605 = vsub.f32 1.0, %v589
  %v606 = vsub.f32 1.0, %v590
  %v607 = vsub.f32 1.0, %v591
  %v608 = vsub.f32 1.0, %v592
  %v609 = vsub.f32 1.0, %v593
  %v610 = vsub.f32 1.0, %v594
  %v611 = vsub.f32 1.0, %v595
  %v612 = vsub.f32 1.0, %v596
  %v613 = vsub.f32 1.0, %v597
  %v614 = vsub.f32 1.0, %v598
  %v615 = vsub.f32 1.0, %v599
  %v616 = vsub.f32 1.0, %v600
  %v617 = vsub.f32 1.0, %v601
  %v618 = vmul.f32 %v250, %v602
  %v619 = vmul.f32 %v251, %v603
  %v620 = vmul.f32 %v252, %v604
  %v621 = vmul.f32 %v253, %v605
  %v622 = vmul.f32 %v254, %v606
  %v623 = vmul.f32 %v255, %v607
  %v624 = vmul.f32 %v256, %v608
  %v625 = vmul.f32 %v257, %v609
  %v626 = vmul.f32 %v258, %v610
  %v627 = vmul.f32 %v259, %v611
  %v628 = vmul.f32 %v260, %v612
  %v629 = vmul.f32 %v261, %v613
  %v630 = vmul.f32 %v262, %v614
  %v631 = vmul.f32 %v263, %v615
  %v632 = vmul.f32 %v264, %v616
  %v633 = vmul.f32 %v265, %v617
  %v634 = vadd.f32 %v618, 1.0
  %v635 = vadd.f32 %v619, 1.0
  %v636 = vadd.f32 %v620, 1.0
  %v637 = vadd.f32 %v621, 1.0
  %v638 = vadd.f32 %v622, 1.0
  %v639 = vadd.f32 %v623, 1.0
  %v640 = vadd.f32 %v624, 1.0
  %v641 = vadd.f32 %v625, 1.0
  %v642 = vadd.f32 %v626, 1.0
  %v643 = vadd.f32 %v627, 1.0
  %v644 = vadd.f32 %v628, 1.0
  %v645 = vadd.f32 %v629, 1.0
  %v646 = vadd.f32 %v630, 1.0
  %v647 = vadd.f32 %v631, 1.0
  %v648 = vadd.f32 %v632, 1.0
  %v649 = vadd.f32 %v633, 1.0
  %v650 = vmul.f32 %v202, %v634
  %v651 = vmul.f32 %v203, %v635
  %v652 = vmul.f32 %v204, %v636
  %v653 = vmul.f32 %v205, %v637
  %v654 = vmul.f32 %v206, %v638
  %v655 = vmul.f32 %v207, %v639
  %v656 = vmul.f32 %v208, %v640
  %v657 = vmul.f32 %v209, %v641
  %v658 = vmul.f32 %v210, %v642
  %v659 = vmul.f32 %v211, %v643
  %v660 = vmul.f32 %v212, %v644
  %v661 = vmul.f32 %v213, %v645
  %v662 = vmul.f32 %v214, %v646
  %v663 = vmul.f32 %v215, %v647
  %v664 = vmul.f32 %v216, %v648
  %v665 = vmul.f32 %v217, %v649
  %v666 = vld [vmem:[%s1] sm:$0xff]
  %v667 = vld [vmem:[%s1 + $0x8] sm:$0xff]
  %v668 = vld [vmem:[%s1 + $0x10] sm:$0xff]
  %v669 = vld [vmem:[%s1 + $0x18] sm:$0xff]
  %v670 = vld [vmem:[%s1 + $0x20] sm:$0xff]
  %v671 = vld [vmem:[%s1 + $0x28] sm:$0xff]
  %v672 = vld [vmem:[%s1 + $0x30] sm:$0xff]
  %v673 = vld [vmem:[%s1 + $0x38] sm:$0xff]
  %v674 = vld [vmem:[%s1 + $0x40] sm:$0xff]
  %v675 = vld [vmem:[%s1 + $0x48] sm:$0xff]
  %v676 = vld [vmem:[%s1 + $0x50] sm:$0xff]
  %v677 = vld [vmem:[%s1 + $0x58] sm:$0xff]
  %v678 = vld [vmem:[%s1 + $0x60] sm:$0xff]
  %v679 = vld [vmem:[%s1 + $0x68] sm:$0xff]
  %v680 = vld [vmem:[%s1 + $0x70] sm:$0xff]
  %v681 = vld [vmem:[%s1 + $0x78] sm:$0xff]
  %v682 = vld [vmem:[%s2] sm:$0xff]
  %v683 = vld [vmem:[%s2 + $0x8] sm:$0xff]
  %v684 = vld [vmem:[%s2 + $0x10] sm:$0xff]
  %v685 = vld [vmem:[%s2 + $0x18] sm:$0xff]
  %v686 = vld [vmem:[%s2 + $0x20] sm:$0xff]
  %v687 = vld [vmem:[%s2 + $0x28] sm:$0xff]
  %v688 = vld [vmem:[%s2 + $0x30] sm:$0xff]
  %v689 = vld [vmem:[%s2 + $0x38] sm:$0xff]
  %v690 = vld [vmem:[%s2 + $0x40] sm:$0xff]
  %v691 = vld [vmem:[%s2 + $0x48] sm:$0xff]
  %v692 = vld [vmem:[%s2 + $0x50] sm:$0xff]
  %v693 = vld [vmem:[%s2 + $0x58] sm:$0xff]
  %v694 = vld [vmem:[%s2 + $0x60] sm:$0xff]
  %v695 = vld [vmem:[%s2 + $0x68] sm:$0xff]
  %v696 = vld [vmem:[%s2 + $0x70] sm:$0xff]
  %v697 = vld [vmem:[%s2 + $0x78] sm:$0xff]
  %vm698 = vcmp.ge.s32.totalorder %v666, 1
  %vm699 = vcmp.ge.s32.totalorder %v667, 1
  %vm700 = vcmp.ge.s32.totalorder %v668, 1
  %vm701 = vcmp.ge.s32.totalorder %v669, 1
  %vm702 = vcmp.ge.s32.totalorder %v670, 1
  %vm703 = vcmp.ge.s32.totalorder %v671, 1
  %vm704 = vcmp.ge.s32.totalorder %v672, 1
  %vm705 = vcmp.ge.s32.totalorder %v673, 1
  %vm706 = vcmp.ge.s32.totalorder %v674, 1
  %vm707 = vcmp.ge.s32.totalorder %v675, 1
  %vm708 = vcmp.ge.s32.totalorder %v676, 1
  %vm709 = vcmp.ge.s32.totalorder %v677, 1
  %vm710 = vcmp.ge.s32.totalorder %v678, 1
  %vm711 = vcmp.ge.s32.totalorder %v679, 1
  %vm712 = vcmp.ge.s32.totalorder %v680, 1
  %vm713 = vcmp.ge.s32.totalorder %v681, 1
  %v714 = vsel %vm698, 1.0, 0.0
  %v715 = vsel %vm699, 1.0, 0.0
  %v716 = vsel %vm700, 1.0, 0.0
  %v717 = vsel %vm701, 1.0, 0.0
  %v718 = vsel %vm702, 1.0, 0.0
  %v719 = vsel %vm703, 1.0, 0.0
  %v720 = vsel %vm704, 1.0, 0.0
  %v721 = vsel %vm705, 1.0, 0.0
  %v722 = vsel %vm706, 1.0, 0.0
  %v723 = vsel %vm707, 1.0, 0.0
  %v724 = vsel %vm708, 1.0, 0.0
  %v725 = vsel %vm709, 1.0, 0.0
  %v726 = vsel %vm710, 1.0, 0.0
  %v727 = vsel %vm711, 1.0, 0.0
  %v728 = vsel %vm712, 1.0, 0.0
  %v729 = vsel %vm713, 1.0, 0.0
  %vm730 = vcmp.le.s32.totalorder %v666, 6
  %vm731 = vcmp.le.s32.totalorder %v667, 6
  %vm732 = vcmp.le.s32.totalorder %v668, 6
  %vm733 = vcmp.le.s32.totalorder %v669, 6
  %vm734 = vcmp.le.s32.totalorder %v670, 6
  %vm735 = vcmp.le.s32.totalorder %v671, 6
  %vm736 = vcmp.le.s32.totalorder %v672, 6
  %vm737 = vcmp.le.s32.totalorder %v673, 6
  %vm738 = vcmp.le.s32.totalorder %v674, 6
  %vm739 = vcmp.le.s32.totalorder %v675, 6
  %vm740 = vcmp.le.s32.totalorder %v676, 6
  %vm741 = vcmp.le.s32.totalorder %v677, 6
  %vm742 = vcmp.le.s32.totalorder %v678, 6
  %vm743 = vcmp.le.s32.totalorder %v679, 6
  %vm744 = vcmp.le.s32.totalorder %v680, 6
  %vm745 = vcmp.le.s32.totalorder %v681, 6
  %v746 = vsel %vm730, 1.0, 0.0
  %v747 = vsel %vm731, 1.0, 0.0
  %v748 = vsel %vm732, 1.0, 0.0
  %v749 = vsel %vm733, 1.0, 0.0
  %v750 = vsel %vm734, 1.0, 0.0
  %v751 = vsel %vm735, 1.0, 0.0
  %v752 = vsel %vm736, 1.0, 0.0
  %v753 = vsel %vm737, 1.0, 0.0
  %v754 = vsel %vm738, 1.0, 0.0
  %v755 = vsel %vm739, 1.0, 0.0
  %v756 = vsel %vm740, 1.0, 0.0
  %v757 = vsel %vm741, 1.0, 0.0
  %v758 = vsel %vm742, 1.0, 0.0
  %v759 = vsel %vm743, 1.0, 0.0
  %v760 = vsel %vm744, 1.0, 0.0
  %v761 = vsel %vm745, 1.0, 0.0
  %vm762 = vcmp.ge.s32.totalorder %v682, 1
  %vm763 = vcmp.ge.s32.totalorder %v683, 1
  %vm764 = vcmp.ge.s32.totalorder %v684, 1
  %vm765 = vcmp.ge.s32.totalorder %v685, 1
  %vm766 = vcmp.ge.s32.totalorder %v686, 1
  %vm767 = vcmp.ge.s32.totalorder %v687, 1
  %vm768 = vcmp.ge.s32.totalorder %v688, 1
  %vm769 = vcmp.ge.s32.totalorder %v689, 1
  %vm770 = vcmp.ge.s32.totalorder %v690, 1
  %vm771 = vcmp.ge.s32.totalorder %v691, 1
  %vm772 = vcmp.ge.s32.totalorder %v692, 1
  %vm773 = vcmp.ge.s32.totalorder %v693, 1
  %vm774 = vcmp.ge.s32.totalorder %v694, 1
  %vm775 = vcmp.ge.s32.totalorder %v695, 1
  %vm776 = vcmp.ge.s32.totalorder %v696, 1
  %vm777 = vcmp.ge.s32.totalorder %v697, 1
  %v778 = vsel %vm762, 1.0, 0.0
  %v779 = vsel %vm763, 1.0, 0.0
  %v780 = vsel %vm764, 1.0, 0.0
  %v781 = vsel %vm765, 1.0, 0.0
  %v782 = vsel %vm766, 1.0, 0.0
  %v783 = vsel %vm767, 1.0, 0.0
  %v784 = vsel %vm768, 1.0, 0.0
  %v785 = vsel %vm769, 1.0, 0.0
  %v786 = vsel %vm770, 1.0, 0.0
  %v787 = vsel %vm771, 1.0, 0.0
  %v788 = vsel %vm772, 1.0, 0.0
  %v789 = vsel %vm773, 1.0, 0.0
  %v790 = vsel %vm774, 1.0, 0.0
  %v791 = vsel %vm775, 1.0, 0.0
  %v792 = vsel %vm776, 1.0, 0.0
  %v793 = vsel %vm777, 1.0, 0.0
  %vm794 = vcmp.le.s32.totalorder %v682, 6
  %vm795 = vcmp.le.s32.totalorder %v683, 6
  %vm796 = vcmp.le.s32.totalorder %v684, 6
  %vm797 = vcmp.le.s32.totalorder %v685, 6
  %vm798 = vcmp.le.s32.totalorder %v686, 6
  %vm799 = vcmp.le.s32.totalorder %v687, 6
  %vm800 = vcmp.le.s32.totalorder %v688, 6
  %vm801 = vcmp.le.s32.totalorder %v689, 6
  %vm802 = vcmp.le.s32.totalorder %v690, 6
  %vm803 = vcmp.le.s32.totalorder %v691, 6
  %vm804 = vcmp.le.s32.totalorder %v692, 6
  %vm805 = vcmp.le.s32.totalorder %v693, 6
  %vm806 = vcmp.le.s32.totalorder %v694, 6
  %vm807 = vcmp.le.s32.totalorder %v695, 6
  %vm808 = vcmp.le.s32.totalorder %v696, 6
  %vm809 = vcmp.le.s32.totalorder %v697, 6
  %v810 = vsel %vm794, 1.0, 0.0
  %v811 = vsel %vm795, 1.0, 0.0
  %v812 = vsel %vm796, 1.0, 0.0
  %v813 = vsel %vm797, 1.0, 0.0
  %v814 = vsel %vm798, 1.0, 0.0
  %v815 = vsel %vm799, 1.0, 0.0
  %v816 = vsel %vm800, 1.0, 0.0
  %v817 = vsel %vm801, 1.0, 0.0
  %v818 = vsel %vm802, 1.0, 0.0
  %v819 = vsel %vm803, 1.0, 0.0
  %v820 = vsel %vm804, 1.0, 0.0
  %v821 = vsel %vm805, 1.0, 0.0
  %v822 = vsel %vm806, 1.0, 0.0
  %v823 = vsel %vm807, 1.0, 0.0
  %v824 = vsel %vm808, 1.0, 0.0
  %v825 = vsel %vm809, 1.0, 0.0
  %v826 = vld [vmem:[%s5] sm:$0xff]
  %v827 = vld [vmem:[%s5 + $0x8] sm:$0x1]
  %v828 = vrot.slane %v650, 7
  %v829 = vrot.slane %v651, 7
  %v830 = vrot.slane %v652, 7
  %v831 = vrot.slane %v653, 7
  %v832 = vrot.slane %v654, 7
  %v833 = vrot.slane %v655, 7
  %v834 = vrot.slane %v656, 7
  %v835 = vrot.slane %v657, 7
  %v836 = vrot.slane %v658, 7
  %v837 = vrot.slane %v659, 7
  %v838 = vrot.slane %v660, 7
  %v839 = vrot.slane %v661, 7
  %v840 = vrot.slane %v662, 7
  %v841 = vrot.slane %v663, 7
  %v842 = vrot.slane %v664, 7
  %v843 = vrot.slane %v665, 7
  %v844 = vlaneseq
  %v845 = vshrl.u32 %v844, 7
  %vm846 = vcmp.lt.s32.totalorder %v845, 1
  %v847 = vsel %vm846, %v842, %v843
  %v848 = vsel %vm846, %v841, %v842
  %v849 = vsel %vm846, %v840, %v841
  %v850 = vsel %vm846, %v839, %v840
  %v851 = vsel %vm846, %v838, %v839
  %v852 = vsel %vm846, %v837, %v838
  %v853 = vsel %vm846, %v836, %v837
  %v854 = vsel %vm846, %v835, %v836
  %v855 = vsel %vm846, %v834, %v835
  %v856 = vsel %vm846, %v833, %v834
  %v857 = vsel %vm846, %v832, %v833
  %v858 = vsel %vm846, %v831, %v832
  %v859 = vsel %vm846, %v830, %v831
  %v860 = vsel %vm846, %v829, %v830
  %v861 = vsel %vm846, %v828, %v829
  %v862 = vsel %vm846, %v843, %v828
  %v863 = vmul.f32 %v714, %v778
  %v864 = vmul.f32 %v715, %v779
  %v865 = vmul.f32 %v716, %v780
  %v866 = vmul.f32 %v717, %v781
  %v867 = vmul.f32 %v718, %v782
  %v868 = vmul.f32 %v719, %v783
  %v869 = vmul.f32 %v720, %v784
  %v870 = vmul.f32 %v721, %v785
  %v871 = vmul.f32 %v722, %v786
  %v872 = vmul.f32 %v723, %v787
  %v873 = vmul.f32 %v724, %v788
  %v874 = vmul.f32 %v725, %v789
  %v875 = vmul.f32 %v726, %v790
  %v876 = vmul.f32 %v727, %v791
  %v877 = vmul.f32 %v728, %v792
  %v878 = vmul.f32 %v729, %v793
  %880 = vset.pattern.permute.xlu0 0
  %881 = vperm.xlu0 %880, %v863
  %v882 = vpop.permute.xlu0 %881
  %885 = vset.pattern.permute.xlu0 0
  %886 = vperm.xlu0 %885, %v864
  %v887 = vpop.permute.xlu0 %886
  %890 = vset.pattern.permute.xlu0 0
  %891 = vperm.xlu0 %890, %v865
  %v892 = vpop.permute.xlu0 %891
  %895 = vset.pattern.permute.xlu0 0
  %896 = vperm.xlu0 %895, %v866
  %v897 = vpop.permute.xlu0 %896
  %900 = vset.pattern.permute.xlu0 0
  %901 = vperm.xlu0 %900, %v867
  %v902 = vpop.permute.xlu0 %901
  %905 = vset.pattern.permute.xlu0 0
  %906 = vperm.xlu0 %905, %v868
  %v907 = vpop.permute.xlu0 %906
  %910 = vset.pattern.permute.xlu0 0
  %911 = vperm.xlu0 %910, %v869
  %v912 = vpop.permute.xlu0 %911
  %915 = vset.pattern.permute.xlu0 0
  %916 = vperm.xlu0 %915, %v870
  %v917 = vpop.permute.xlu0 %916
  %920 = vset.pattern.permute.xlu0 0
  %921 = vperm.xlu0 %920, %v871
  %v922 = vpop.permute.xlu0 %921
  %925 = vset.pattern.permute.xlu0 0
  %926 = vperm.xlu0 %925, %v872
  %v927 = vpop.permute.xlu0 %926
  %930 = vset.pattern.permute.xlu0 0
  %931 = vperm.xlu0 %930, %v873
  %v932 = vpop.permute.xlu0 %931
  %935 = vset.pattern.permute.xlu0 0
  %936 = vperm.xlu0 %935, %v874
  %v937 = vpop.permute.xlu0 %936
  %940 = vset.pattern.permute.xlu0 0
  %941 = vperm.xlu0 %940, %v875
  %v942 = vpop.permute.xlu0 %941
  %945 = vset.pattern.permute.xlu0 0
  %946 = vperm.xlu0 %945, %v876
  %v947 = vpop.permute.xlu0 %946
  %950 = vset.pattern.permute.xlu0 0
  %951 = vperm.xlu0 %950, %v877
  %v952 = vpop.permute.xlu0 %951
  %955 = vset.pattern.permute.xlu0 0
  %956 = vperm.xlu0 %955, %v878
  %v957 = vpop.permute.xlu0 %956
  %v959 = vmul.f32 %v847, %v882
  %v960 = vmul.f32 %v862, %v887
  %v961 = vmul.f32 %v861, %v892
  %v962 = vmul.f32 %v860, %v897
  %v963 = vmul.f32 %v859, %v902
  %v964 = vmul.f32 %v858, %v907
  %v965 = vmul.f32 %v857, %v912
  %v966 = vmul.f32 %v856, %v917
  %v967 = vmul.f32 %v855, %v922
  %v968 = vmul.f32 %v854, %v927
  %v969 = vmul.f32 %v853, %v932
  %v970 = vmul.f32 %v852, %v937
  %v971 = vmul.f32 %v851, %v942
  %v972 = vmul.f32 %v850, %v947
  %v973 = vmul.f32 %v849, %v952
  %v974 = vmul.f32 %v848, %v957
  %v975 = vlaneseq
  %v976 = vshrl.u32 %v975, 7
  %v977 = vsub.s32 0, %v976
  %v978 = vrot.slane %v826, %v977
  %v979 = vmul.f32 %v959, %v978
  %v980 = vmul.f32 %v960, %v978
  %v981 = vmul.f32 %v961, %v978
  %v982 = vmul.f32 %v962, %v978
  %v983 = vmul.f32 %v963, %v978
  %v984 = vmul.f32 %v964, %v978
  %v985 = vmul.f32 %v965, %v978
  %v986 = vmul.f32 %v966, %v978
  %v987 = vmul.f32 %v967, %v978
  %v988 = vmul.f32 %v968, %v978
  %v989 = vmul.f32 %v969, %v978
  %v990 = vmul.f32 %v970, %v978
  %v991 = vmul.f32 %v971, %v978
  %v992 = vmul.f32 %v972, %v978
  %v993 = vmul.f32 %v973, %v978
  %v994 = vmul.f32 %v974, %v978
  %v995 = vadd.f32 %v979, 0.0
  %v996 = vadd.f32 %v980, 0.0
  %v997 = vadd.f32 %v981, 0.0
  %v998 = vadd.f32 %v982, 0.0
  %v999 = vadd.f32 %v983, 0.0
  %v1000 = vadd.f32 %v984, 0.0
  %v1001 = vadd.f32 %v985, 0.0
  %v1002 = vadd.f32 %v986, 0.0
  %v1003 = vadd.f32 %v987, 0.0
  %v1004 = vadd.f32 %v988, 0.0
  %v1005 = vadd.f32 %v989, 0.0
  %v1006 = vadd.f32 %v990, 0.0
  %v1007 = vadd.f32 %v991, 0.0
  %v1008 = vadd.f32 %v992, 0.0
  %v1009 = vadd.f32 %v993, 0.0
  %v1010 = vadd.f32 %v994, 0.0
  %1012 = vset.pattern.permute.xlu0 0
  %1013 = vperm.xlu0 %1012, %v714
  %v1014 = vpop.permute.xlu0 %1013
  %1017 = vset.pattern.permute.xlu0 0
  %1018 = vperm.xlu0 %1017, %v715
  %v1019 = vpop.permute.xlu0 %1018
  %1022 = vset.pattern.permute.xlu0 0
  %1023 = vperm.xlu0 %1022, %v716
  %v1024 = vpop.permute.xlu0 %1023
  %1027 = vset.pattern.permute.xlu0 0
  %1028 = vperm.xlu0 %1027, %v717
  %v1029 = vpop.permute.xlu0 %1028
  %1032 = vset.pattern.permute.xlu0 0
  %1033 = vperm.xlu0 %1032, %v718
  %v1034 = vpop.permute.xlu0 %1033
  %1037 = vset.pattern.permute.xlu0 0
  %1038 = vperm.xlu0 %1037, %v719
  %v1039 = vpop.permute.xlu0 %1038
  %1042 = vset.pattern.permute.xlu0 0
  %1043 = vperm.xlu0 %1042, %v720
  %v1044 = vpop.permute.xlu0 %1043
  %1047 = vset.pattern.permute.xlu0 0
  %1048 = vperm.xlu0 %1047, %v721
  %v1049 = vpop.permute.xlu0 %1048
  %1052 = vset.pattern.permute.xlu0 0
  %1053 = vperm.xlu0 %1052, %v722
  %v1054 = vpop.permute.xlu0 %1053
  %1057 = vset.pattern.permute.xlu0 0
  %1058 = vperm.xlu0 %1057, %v723
  %v1059 = vpop.permute.xlu0 %1058
  %1062 = vset.pattern.permute.xlu0 0
  %1063 = vperm.xlu0 %1062, %v724
  %v1064 = vpop.permute.xlu0 %1063
  %1067 = vset.pattern.permute.xlu0 0
  %1068 = vperm.xlu0 %1067, %v725
  %v1069 = vpop.permute.xlu0 %1068
  %1072 = vset.pattern.permute.xlu0 0
  %1073 = vperm.xlu0 %1072, %v726
  %v1074 = vpop.permute.xlu0 %1073
  %1077 = vset.pattern.permute.xlu0 0
  %1078 = vperm.xlu0 %1077, %v727
  %v1079 = vpop.permute.xlu0 %1078
  %1082 = vset.pattern.permute.xlu0 0
  %1083 = vperm.xlu0 %1082, %v728
  %v1084 = vpop.permute.xlu0 %1083
  %1087 = vset.pattern.permute.xlu0 0
  %1088 = vperm.xlu0 %1087, %v729
  %v1089 = vpop.permute.xlu0 %1088
  %v1091 = vmul.f32 %v665, %v1014
  %v1092 = vmul.f32 %v650, %v1019
  %v1093 = vmul.f32 %v651, %v1024
  %v1094 = vmul.f32 %v652, %v1029
  %v1095 = vmul.f32 %v653, %v1034
  %v1096 = vmul.f32 %v654, %v1039
  %v1097 = vmul.f32 %v655, %v1044
  %v1098 = vmul.f32 %v656, %v1049
  %v1099 = vmul.f32 %v657, %v1054
  %v1100 = vmul.f32 %v658, %v1059
  %v1101 = vmul.f32 %v659, %v1064
  %v1102 = vmul.f32 %v660, %v1069
  %v1103 = vmul.f32 %v661, %v1074
  %v1104 = vmul.f32 %v662, %v1079
  %v1105 = vmul.f32 %v663, %v1084
  %v1106 = vmul.f32 %v664, %v1089
  %v1107 = vlaneseq
  %v1108 = vshrl.u32 %v1107, 7
  %v1109 = vsub.s32 1, %v1108
  %v1110 = vrot.slane %v826, %v1109
  %v1111 = vmul.f32 %v1091, %v1110
  %v1112 = vmul.f32 %v1092, %v1110
  %v1113 = vmul.f32 %v1093, %v1110
  %v1114 = vmul.f32 %v1094, %v1110
  %v1115 = vmul.f32 %v1095, %v1110
  %v1116 = vmul.f32 %v1096, %v1110
  %v1117 = vmul.f32 %v1097, %v1110
  %v1118 = vmul.f32 %v1098, %v1110
  %v1119 = vmul.f32 %v1099, %v1110
  %v1120 = vmul.f32 %v1100, %v1110
  %v1121 = vmul.f32 %v1101, %v1110
  %v1122 = vmul.f32 %v1102, %v1110
  %v1123 = vmul.f32 %v1103, %v1110
  %v1124 = vmul.f32 %v1104, %v1110
  %v1125 = vmul.f32 %v1105, %v1110
  %v1126 = vmul.f32 %v1106, %v1110
  %v1127 = vadd.f32 %v995, %v1111
  %v1128 = vadd.f32 %v996, %v1112
  %v1129 = vadd.f32 %v997, %v1113
  %v1130 = vadd.f32 %v998, %v1114
  %v1131 = vadd.f32 %v999, %v1115
  %v1132 = vadd.f32 %v1000, %v1116
  %v1133 = vadd.f32 %v1001, %v1117
  %v1134 = vadd.f32 %v1002, %v1118
  %v1135 = vadd.f32 %v1003, %v1119
  %v1136 = vadd.f32 %v1004, %v1120
  %v1137 = vadd.f32 %v1005, %v1121
  %v1138 = vadd.f32 %v1006, %v1122
  %v1139 = vadd.f32 %v1007, %v1123
  %v1140 = vadd.f32 %v1008, %v1124
  %v1141 = vadd.f32 %v1009, %v1125
  %v1142 = vadd.f32 %v1010, %v1126
  %v1143 = vrot.slane %v650, 1
  %v1144 = vrot.slane %v651, 1
  %v1145 = vrot.slane %v652, 1
  %v1146 = vrot.slane %v653, 1
  %v1147 = vrot.slane %v654, 1
  %v1148 = vrot.slane %v655, 1
  %v1149 = vrot.slane %v656, 1
  %v1150 = vrot.slane %v657, 1
  %v1151 = vrot.slane %v658, 1
  %v1152 = vrot.slane %v659, 1
  %v1153 = vrot.slane %v660, 1
  %v1154 = vrot.slane %v661, 1
  %v1155 = vrot.slane %v662, 1
  %v1156 = vrot.slane %v663, 1
  %v1157 = vrot.slane %v664, 1
  %v1158 = vrot.slane %v665, 1
  %vm1159 = vcmp.lt.s32.totalorder %v845, 7
  %v1160 = vsel %vm1159, %v1157, %v1158
  %v1161 = vsel %vm1159, %v1156, %v1157
  %v1162 = vsel %vm1159, %v1155, %v1156
  %v1163 = vsel %vm1159, %v1154, %v1155
  %v1164 = vsel %vm1159, %v1153, %v1154
  %v1165 = vsel %vm1159, %v1152, %v1153
  %v1166 = vsel %vm1159, %v1151, %v1152
  %v1167 = vsel %vm1159, %v1150, %v1151
  %v1168 = vsel %vm1159, %v1149, %v1150
  %v1169 = vsel %vm1159, %v1148, %v1149
  %v1170 = vsel %vm1159, %v1147, %v1148
  %v1171 = vsel %vm1159, %v1146, %v1147
  %v1172 = vsel %vm1159, %v1145, %v1146
  %v1173 = vsel %vm1159, %v1144, %v1145
  %v1174 = vsel %vm1159, %v1143, %v1144
  %v1175 = vsel %vm1159, %v1158, %v1143
  %v1176 = vmul.f32 %v714, %v810
  %v1177 = vmul.f32 %v715, %v811
  %v1178 = vmul.f32 %v716, %v812
  %v1179 = vmul.f32 %v717, %v813
  %v1180 = vmul.f32 %v718, %v814
  %v1181 = vmul.f32 %v719, %v815
  %v1182 = vmul.f32 %v720, %v816
  %v1183 = vmul.f32 %v721, %v817
  %v1184 = vmul.f32 %v722, %v818
  %v1185 = vmul.f32 %v723, %v819
  %v1186 = vmul.f32 %v724, %v820
  %v1187 = vmul.f32 %v725, %v821
  %v1188 = vmul.f32 %v726, %v822
  %v1189 = vmul.f32 %v727, %v823
  %v1190 = vmul.f32 %v728, %v824
  %v1191 = vmul.f32 %v729, %v825
  %1193 = vset.pattern.permute.xlu0 0
  %1194 = vperm.xlu0 %1193, %v1176
  %v1195 = vpop.permute.xlu0 %1194
  %1198 = vset.pattern.permute.xlu0 0
  %1199 = vperm.xlu0 %1198, %v1177
  %v1200 = vpop.permute.xlu0 %1199
  %1203 = vset.pattern.permute.xlu0 0
  %1204 = vperm.xlu0 %1203, %v1178
  %v1205 = vpop.permute.xlu0 %1204
  %1208 = vset.pattern.permute.xlu0 0
  %1209 = vperm.xlu0 %1208, %v1179
  %v1210 = vpop.permute.xlu0 %1209
  %1213 = vset.pattern.permute.xlu0 0
  %1214 = vperm.xlu0 %1213, %v1180
  %v1215 = vpop.permute.xlu0 %1214
  %1218 = vset.pattern.permute.xlu0 0
  %1219 = vperm.xlu0 %1218, %v1181
  %v1220 = vpop.permute.xlu0 %1219
  %1223 = vset.pattern.permute.xlu0 0
  %1224 = vperm.xlu0 %1223, %v1182
  %v1225 = vpop.permute.xlu0 %1224
  %1228 = vset.pattern.permute.xlu0 0
  %1229 = vperm.xlu0 %1228, %v1183
  %v1230 = vpop.permute.xlu0 %1229
  %1233 = vset.pattern.permute.xlu0 0
  %1234 = vperm.xlu0 %1233, %v1184
  %v1235 = vpop.permute.xlu0 %1234
  %1238 = vset.pattern.permute.xlu0 0
  %1239 = vperm.xlu0 %1238, %v1185
  %v1240 = vpop.permute.xlu0 %1239
  %1243 = vset.pattern.permute.xlu0 0
  %1244 = vperm.xlu0 %1243, %v1186
  %v1245 = vpop.permute.xlu0 %1244
  %1248 = vset.pattern.permute.xlu0 0
  %1249 = vperm.xlu0 %1248, %v1187
  %v1250 = vpop.permute.xlu0 %1249
  %1253 = vset.pattern.permute.xlu0 0
  %1254 = vperm.xlu0 %1253, %v1188
  %v1255 = vpop.permute.xlu0 %1254
  %1258 = vset.pattern.permute.xlu0 0
  %1259 = vperm.xlu0 %1258, %v1189
  %v1260 = vpop.permute.xlu0 %1259
  %1263 = vset.pattern.permute.xlu0 0
  %1264 = vperm.xlu0 %1263, %v1190
  %v1265 = vpop.permute.xlu0 %1264
  %1268 = vset.pattern.permute.xlu0 0
  %1269 = vperm.xlu0 %1268, %v1191
  %v1270 = vpop.permute.xlu0 %1269
  %v1272 = vmul.f32 %v1175, %v1195
  %v1273 = vmul.f32 %v1174, %v1200
  %v1274 = vmul.f32 %v1173, %v1205
  %v1275 = vmul.f32 %v1172, %v1210
  %v1276 = vmul.f32 %v1171, %v1215
  %v1277 = vmul.f32 %v1170, %v1220
  %v1278 = vmul.f32 %v1169, %v1225
  %v1279 = vmul.f32 %v1168, %v1230
  %v1280 = vmul.f32 %v1167, %v1235
  %v1281 = vmul.f32 %v1166, %v1240
  %v1282 = vmul.f32 %v1165, %v1245
  %v1283 = vmul.f32 %v1164, %v1250
  %v1284 = vmul.f32 %v1163, %v1255
  %v1285 = vmul.f32 %v1162, %v1260
  %v1286 = vmul.f32 %v1161, %v1265
  %v1287 = vmul.f32 %v1160, %v1270
  %v1288 = vlaneseq
  %v1289 = vshrl.u32 %v1288, 7
  %v1290 = vsub.s32 2, %v1289
  %v1291 = vrot.slane %v826, %v1290
  %v1292 = vmul.f32 %v1272, %v1291
  %v1293 = vmul.f32 %v1273, %v1291
  %v1294 = vmul.f32 %v1274, %v1291
  %v1295 = vmul.f32 %v1275, %v1291
  %v1296 = vmul.f32 %v1276, %v1291
  %v1297 = vmul.f32 %v1277, %v1291
  %v1298 = vmul.f32 %v1278, %v1291
  %v1299 = vmul.f32 %v1279, %v1291
  %v1300 = vmul.f32 %v1280, %v1291
  %v1301 = vmul.f32 %v1281, %v1291
  %v1302 = vmul.f32 %v1282, %v1291
  %v1303 = vmul.f32 %v1283, %v1291
  %v1304 = vmul.f32 %v1284, %v1291
  %v1305 = vmul.f32 %v1285, %v1291
  %v1306 = vmul.f32 %v1286, %v1291
  %v1307 = vmul.f32 %v1287, %v1291
  %v1308 = vadd.f32 %v1127, %v1292
  %v1309 = vadd.f32 %v1128, %v1293
  %v1310 = vadd.f32 %v1129, %v1294
  %v1311 = vadd.f32 %v1130, %v1295
  %v1312 = vadd.f32 %v1131, %v1296
  %v1313 = vadd.f32 %v1132, %v1297
  %v1314 = vadd.f32 %v1133, %v1298
  %v1315 = vadd.f32 %v1134, %v1299
  %v1316 = vadd.f32 %v1135, %v1300
  %v1317 = vadd.f32 %v1136, %v1301
  %v1318 = vadd.f32 %v1137, %v1302
  %v1319 = vadd.f32 %v1138, %v1303
  %v1320 = vadd.f32 %v1139, %v1304
  %v1321 = vadd.f32 %v1140, %v1305
  %v1322 = vadd.f32 %v1141, %v1306
  %v1323 = vadd.f32 %v1142, %v1307
  %1325 = vset.pattern.permute.xlu0 0
  %1326 = vperm.xlu0 %1325, %v778
  %v1327 = vpop.permute.xlu0 %1326
  %1330 = vset.pattern.permute.xlu0 0
  %1331 = vperm.xlu0 %1330, %v779
  %v1332 = vpop.permute.xlu0 %1331
  %1335 = vset.pattern.permute.xlu0 0
  %1336 = vperm.xlu0 %1335, %v780
  %v1337 = vpop.permute.xlu0 %1336
  %1340 = vset.pattern.permute.xlu0 0
  %1341 = vperm.xlu0 %1340, %v781
  %v1342 = vpop.permute.xlu0 %1341
  %1345 = vset.pattern.permute.xlu0 0
  %1346 = vperm.xlu0 %1345, %v782
  %v1347 = vpop.permute.xlu0 %1346
  %1350 = vset.pattern.permute.xlu0 0
  %1351 = vperm.xlu0 %1350, %v783
  %v1352 = vpop.permute.xlu0 %1351
  %1355 = vset.pattern.permute.xlu0 0
  %1356 = vperm.xlu0 %1355, %v784
  %v1357 = vpop.permute.xlu0 %1356
  %1360 = vset.pattern.permute.xlu0 0
  %1361 = vperm.xlu0 %1360, %v785
  %v1362 = vpop.permute.xlu0 %1361
  %1365 = vset.pattern.permute.xlu0 0
  %1366 = vperm.xlu0 %1365, %v786
  %v1367 = vpop.permute.xlu0 %1366
  %1370 = vset.pattern.permute.xlu0 0
  %1371 = vperm.xlu0 %1370, %v787
  %v1372 = vpop.permute.xlu0 %1371
  %1375 = vset.pattern.permute.xlu0 0
  %1376 = vperm.xlu0 %1375, %v788
  %v1377 = vpop.permute.xlu0 %1376
  %1380 = vset.pattern.permute.xlu0 0
  %1381 = vperm.xlu0 %1380, %v789
  %v1382 = vpop.permute.xlu0 %1381
  %1385 = vset.pattern.permute.xlu0 0
  %1386 = vperm.xlu0 %1385, %v790
  %v1387 = vpop.permute.xlu0 %1386
  %1390 = vset.pattern.permute.xlu0 0
  %1391 = vperm.xlu0 %1390, %v791
  %v1392 = vpop.permute.xlu0 %1391
  %1395 = vset.pattern.permute.xlu0 0
  %1396 = vperm.xlu0 %1395, %v792
  %v1397 = vpop.permute.xlu0 %1396
  %1400 = vset.pattern.permute.xlu0 0
  %1401 = vperm.xlu0 %1400, %v793
  %v1402 = vpop.permute.xlu0 %1401
  %v1404 = vmul.f32 %v862, %v1327
  %v1405 = vmul.f32 %v861, %v1332
  %v1406 = vmul.f32 %v860, %v1337
  %v1407 = vmul.f32 %v859, %v1342
  %v1408 = vmul.f32 %v858, %v1347
  %v1409 = vmul.f32 %v857, %v1352
  %v1410 = vmul.f32 %v856, %v1357
  %v1411 = vmul.f32 %v855, %v1362
  %v1412 = vmul.f32 %v854, %v1367
  %v1413 = vmul.f32 %v853, %v1372
  %v1414 = vmul.f32 %v852, %v1377
  %v1415 = vmul.f32 %v851, %v1382
  %v1416 = vmul.f32 %v850, %v1387
  %v1417 = vmul.f32 %v849, %v1392
  %v1418 = vmul.f32 %v848, %v1397
  %v1419 = vmul.f32 %v847, %v1402
  %v1420 = vlaneseq
  %v1421 = vshrl.u32 %v1420, 7
  %v1422 = vsub.s32 3, %v1421
  %v1423 = vrot.slane %v826, %v1422
  %v1424 = vmul.f32 %v1404, %v1423
  %v1425 = vmul.f32 %v1405, %v1423
  %v1426 = vmul.f32 %v1406, %v1423
  %v1427 = vmul.f32 %v1407, %v1423
  %v1428 = vmul.f32 %v1408, %v1423
  %v1429 = vmul.f32 %v1409, %v1423
  %v1430 = vmul.f32 %v1410, %v1423
  %v1431 = vmul.f32 %v1411, %v1423
  %v1432 = vmul.f32 %v1412, %v1423
  %v1433 = vmul.f32 %v1413, %v1423
  %v1434 = vmul.f32 %v1414, %v1423
  %v1435 = vmul.f32 %v1415, %v1423
  %v1436 = vmul.f32 %v1416, %v1423
  %v1437 = vmul.f32 %v1417, %v1423
  %v1438 = vmul.f32 %v1418, %v1423
  %v1439 = vmul.f32 %v1419, %v1423
  %v1440 = vadd.f32 %v1308, %v1424
  %v1441 = vadd.f32 %v1309, %v1425
  %v1442 = vadd.f32 %v1310, %v1426
  %v1443 = vadd.f32 %v1311, %v1427
  %v1444 = vadd.f32 %v1312, %v1428
  %v1445 = vadd.f32 %v1313, %v1429
  %v1446 = vadd.f32 %v1314, %v1430
  %v1447 = vadd.f32 %v1315, %v1431
  %v1448 = vadd.f32 %v1316, %v1432
  %v1449 = vadd.f32 %v1317, %v1433
  %v1450 = vadd.f32 %v1318, %v1434
  %v1451 = vadd.f32 %v1319, %v1435
  %v1452 = vadd.f32 %v1320, %v1436
  %v1453 = vadd.f32 %v1321, %v1437
  %v1454 = vadd.f32 %v1322, %v1438
  %v1455 = vadd.f32 %v1323, %v1439
  %v1456 = vlaneseq
  %v1457 = vshrl.u32 %v1456, 7
  %v1458 = vsub.s32 4, %v1457
  %v1459 = vrot.slane %v826, %v1458
  %v1460 = vmul.f32 %v650, %v1459
  %v1461 = vmul.f32 %v651, %v1459
  %v1462 = vmul.f32 %v652, %v1459
  %v1463 = vmul.f32 %v653, %v1459
  %v1464 = vmul.f32 %v654, %v1459
  %v1465 = vmul.f32 %v655, %v1459
  %v1466 = vmul.f32 %v656, %v1459
  %v1467 = vmul.f32 %v657, %v1459
  %v1468 = vmul.f32 %v658, %v1459
  %v1469 = vmul.f32 %v659, %v1459
  %v1470 = vmul.f32 %v660, %v1459
  %v1471 = vmul.f32 %v661, %v1459
  %v1472 = vmul.f32 %v662, %v1459
  %v1473 = vmul.f32 %v663, %v1459
  %v1474 = vmul.f32 %v664, %v1459
  %v1475 = vmul.f32 %v665, %v1459
  %v1476 = vadd.f32 %v1440, %v1460
  %v1477 = vadd.f32 %v1441, %v1461
  %v1478 = vadd.f32 %v1442, %v1462
  %v1479 = vadd.f32 %v1443, %v1463
  %v1480 = vadd.f32 %v1444, %v1464
  %v1481 = vadd.f32 %v1445, %v1465
  %v1482 = vadd.f32 %v1446, %v1466
  %v1483 = vadd.f32 %v1447, %v1467
  %v1484 = vadd.f32 %v1448, %v1468
  %v1485 = vadd.f32 %v1449, %v1469
  %v1486 = vadd.f32 %v1450, %v1470
  %v1487 = vadd.f32 %v1451, %v1471
  %v1488 = vadd.f32 %v1452, %v1472
  %v1489 = vadd.f32 %v1453, %v1473
  %v1490 = vadd.f32 %v1454, %v1474
  %v1491 = vadd.f32 %v1455, %v1475
  %1493 = vset.pattern.permute.xlu0 0
  %1494 = vperm.xlu0 %1493, %v810
  %v1495 = vpop.permute.xlu0 %1494
  %1498 = vset.pattern.permute.xlu0 0
  %1499 = vperm.xlu0 %1498, %v811
  %v1500 = vpop.permute.xlu0 %1499
  %1503 = vset.pattern.permute.xlu0 0
  %1504 = vperm.xlu0 %1503, %v812
  %v1505 = vpop.permute.xlu0 %1504
  %1508 = vset.pattern.permute.xlu0 0
  %1509 = vperm.xlu0 %1508, %v813
  %v1510 = vpop.permute.xlu0 %1509
  %1513 = vset.pattern.permute.xlu0 0
  %1514 = vperm.xlu0 %1513, %v814
  %v1515 = vpop.permute.xlu0 %1514
  %1518 = vset.pattern.permute.xlu0 0
  %1519 = vperm.xlu0 %1518, %v815
  %v1520 = vpop.permute.xlu0 %1519
  %1523 = vset.pattern.permute.xlu0 0
  %1524 = vperm.xlu0 %1523, %v816
  %v1525 = vpop.permute.xlu0 %1524
  %1528 = vset.pattern.permute.xlu0 0
  %1529 = vperm.xlu0 %1528, %v817
  %v1530 = vpop.permute.xlu0 %1529
  %1533 = vset.pattern.permute.xlu0 0
  %1534 = vperm.xlu0 %1533, %v818
  %v1535 = vpop.permute.xlu0 %1534
  %1538 = vset.pattern.permute.xlu0 0
  %1539 = vperm.xlu0 %1538, %v819
  %v1540 = vpop.permute.xlu0 %1539
  %1543 = vset.pattern.permute.xlu0 0
  %1544 = vperm.xlu0 %1543, %v820
  %v1545 = vpop.permute.xlu0 %1544
  %1548 = vset.pattern.permute.xlu0 0
  %1549 = vperm.xlu0 %1548, %v821
  %v1550 = vpop.permute.xlu0 %1549
  %1553 = vset.pattern.permute.xlu0 0
  %1554 = vperm.xlu0 %1553, %v822
  %v1555 = vpop.permute.xlu0 %1554
  %1558 = vset.pattern.permute.xlu0 0
  %1559 = vperm.xlu0 %1558, %v823
  %v1560 = vpop.permute.xlu0 %1559
  %1563 = vset.pattern.permute.xlu0 0
  %1564 = vperm.xlu0 %1563, %v824
  %v1565 = vpop.permute.xlu0 %1564
  %1568 = vset.pattern.permute.xlu0 0
  %1569 = vperm.xlu0 %1568, %v825
  %v1570 = vpop.permute.xlu0 %1569
  %v1572 = vmul.f32 %v1174, %v1495
  %v1573 = vmul.f32 %v1173, %v1500
  %v1574 = vmul.f32 %v1172, %v1505
  %v1575 = vmul.f32 %v1171, %v1510
  %v1576 = vmul.f32 %v1170, %v1515
  %v1577 = vmul.f32 %v1169, %v1520
  %v1578 = vmul.f32 %v1168, %v1525
  %v1579 = vmul.f32 %v1167, %v1530
  %v1580 = vmul.f32 %v1166, %v1535
  %v1581 = vmul.f32 %v1165, %v1540
  %v1582 = vmul.f32 %v1164, %v1545
  %v1583 = vmul.f32 %v1163, %v1550
  %v1584 = vmul.f32 %v1162, %v1555
  %v1585 = vmul.f32 %v1161, %v1560
  %v1586 = vmul.f32 %v1160, %v1565
  %v1587 = vmul.f32 %v1175, %v1570
  %v1588 = vlaneseq
  %v1589 = vshrl.u32 %v1588, 7
  %v1590 = vsub.s32 5, %v1589
  %v1591 = vrot.slane %v826, %v1590
  %v1592 = vmul.f32 %v1572, %v1591
  %v1593 = vmul.f32 %v1573, %v1591
  %v1594 = vmul.f32 %v1574, %v1591
  %v1595 = vmul.f32 %v1575, %v1591
  %v1596 = vmul.f32 %v1576, %v1591
  %v1597 = vmul.f32 %v1577, %v1591
  %v1598 = vmul.f32 %v1578, %v1591
  %v1599 = vmul.f32 %v1579, %v1591
  %v1600 = vmul.f32 %v1580, %v1591
  %v1601 = vmul.f32 %v1581, %v1591
  %v1602 = vmul.f32 %v1582, %v1591
  %v1603 = vmul.f32 %v1583, %v1591
  %v1604 = vmul.f32 %v1584, %v1591
  %v1605 = vmul.f32 %v1585, %v1591
  %v1606 = vmul.f32 %v1586, %v1591
  %v1607 = vmul.f32 %v1587, %v1591
  %v1608 = vadd.f32 %v1476, %v1592
  %v1609 = vadd.f32 %v1477, %v1593
  %v1610 = vadd.f32 %v1478, %v1594
  %v1611 = vadd.f32 %v1479, %v1595
  %v1612 = vadd.f32 %v1480, %v1596
  %v1613 = vadd.f32 %v1481, %v1597
  %v1614 = vadd.f32 %v1482, %v1598
  %v1615 = vadd.f32 %v1483, %v1599
  %v1616 = vadd.f32 %v1484, %v1600
  %v1617 = vadd.f32 %v1485, %v1601
  %v1618 = vadd.f32 %v1486, %v1602
  %v1619 = vadd.f32 %v1487, %v1603
  %v1620 = vadd.f32 %v1488, %v1604
  %v1621 = vadd.f32 %v1489, %v1605
  %v1622 = vadd.f32 %v1490, %v1606
  %v1623 = vadd.f32 %v1491, %v1607
  %v1624 = vmul.f32 %v746, %v778
  %v1625 = vmul.f32 %v747, %v779
  %v1626 = vmul.f32 %v748, %v780
  %v1627 = vmul.f32 %v749, %v781
  %v1628 = vmul.f32 %v750, %v782
  %v1629 = vmul.f32 %v751, %v783
  %v1630 = vmul.f32 %v752, %v784
  %v1631 = vmul.f32 %v753, %v785
  %v1632 = vmul.f32 %v754, %v786
  %v1633 = vmul.f32 %v755, %v787
  %v1634 = vmul.f32 %v756, %v788
  %v1635 = vmul.f32 %v757, %v789
  %v1636 = vmul.f32 %v758, %v790
  %v1637 = vmul.f32 %v759, %v791
  %v1638 = vmul.f32 %v760, %v792
  %v1639 = vmul.f32 %v761, %v793
  %1641 = vset.pattern.permute.xlu0 0
  %1642 = vperm.xlu0 %1641, %v1624
  %v1643 = vpop.permute.xlu0 %1642
  %1646 = vset.pattern.permute.xlu0 0
  %1647 = vperm.xlu0 %1646, %v1625
  %v1648 = vpop.permute.xlu0 %1647
  %1651 = vset.pattern.permute.xlu0 0
  %1652 = vperm.xlu0 %1651, %v1626
  %v1653 = vpop.permute.xlu0 %1652
  %1656 = vset.pattern.permute.xlu0 0
  %1657 = vperm.xlu0 %1656, %v1627
  %v1658 = vpop.permute.xlu0 %1657
  %1661 = vset.pattern.permute.xlu0 0
  %1662 = vperm.xlu0 %1661, %v1628
  %v1663 = vpop.permute.xlu0 %1662
  %1666 = vset.pattern.permute.xlu0 0
  %1667 = vperm.xlu0 %1666, %v1629
  %v1668 = vpop.permute.xlu0 %1667
  %1671 = vset.pattern.permute.xlu0 0
  %1672 = vperm.xlu0 %1671, %v1630
  %v1673 = vpop.permute.xlu0 %1672
  %1676 = vset.pattern.permute.xlu0 0
  %1677 = vperm.xlu0 %1676, %v1631
  %v1678 = vpop.permute.xlu0 %1677
  %1681 = vset.pattern.permute.xlu0 0
  %1682 = vperm.xlu0 %1681, %v1632
  %v1683 = vpop.permute.xlu0 %1682
  %1686 = vset.pattern.permute.xlu0 0
  %1687 = vperm.xlu0 %1686, %v1633
  %v1688 = vpop.permute.xlu0 %1687
  %1691 = vset.pattern.permute.xlu0 0
  %1692 = vperm.xlu0 %1691, %v1634
  %v1693 = vpop.permute.xlu0 %1692
  %1696 = vset.pattern.permute.xlu0 0
  %1697 = vperm.xlu0 %1696, %v1635
  %v1698 = vpop.permute.xlu0 %1697
  %1701 = vset.pattern.permute.xlu0 0
  %1702 = vperm.xlu0 %1701, %v1636
  %v1703 = vpop.permute.xlu0 %1702
  %1706 = vset.pattern.permute.xlu0 0
  %1707 = vperm.xlu0 %1706, %v1637
  %v1708 = vpop.permute.xlu0 %1707
  %1711 = vset.pattern.permute.xlu0 0
  %1712 = vperm.xlu0 %1711, %v1638
  %v1713 = vpop.permute.xlu0 %1712
  %1716 = vset.pattern.permute.xlu0 0
  %1717 = vperm.xlu0 %1716, %v1639
  %v1718 = vpop.permute.xlu0 %1717
  %v1720 = vmul.f32 %v861, %v1643
  %v1721 = vmul.f32 %v860, %v1648
  %v1722 = vmul.f32 %v859, %v1653
  %v1723 = vmul.f32 %v858, %v1658
  %v1724 = vmul.f32 %v857, %v1663
  %v1725 = vmul.f32 %v856, %v1668
  %v1726 = vmul.f32 %v855, %v1673
  %v1727 = vmul.f32 %v854, %v1678
  %v1728 = vmul.f32 %v853, %v1683
  %v1729 = vmul.f32 %v852, %v1688
  %v1730 = vmul.f32 %v851, %v1693
  %v1731 = vmul.f32 %v850, %v1698
  %v1732 = vmul.f32 %v849, %v1703
  %v1733 = vmul.f32 %v848, %v1708
  %v1734 = vmul.f32 %v847, %v1713
  %v1735 = vmul.f32 %v862, %v1718
  %v1736 = vlaneseq
  %v1737 = vshrl.u32 %v1736, 7
  %v1738 = vsub.s32 6, %v1737
  %v1739 = vrot.slane %v826, %v1738
  %v1740 = vmul.f32 %v1720, %v1739
  %v1741 = vmul.f32 %v1721, %v1739
  %v1742 = vmul.f32 %v1722, %v1739
  %v1743 = vmul.f32 %v1723, %v1739
  %v1744 = vmul.f32 %v1724, %v1739
  %v1745 = vmul.f32 %v1725, %v1739
  %v1746 = vmul.f32 %v1726, %v1739
  %v1747 = vmul.f32 %v1727, %v1739
  %v1748 = vmul.f32 %v1728, %v1739
  %v1749 = vmul.f32 %v1729, %v1739
  %v1750 = vmul.f32 %v1730, %v1739
  %v1751 = vmul.f32 %v1731, %v1739
  %v1752 = vmul.f32 %v1732, %v1739
  %v1753 = vmul.f32 %v1733, %v1739
  %v1754 = vmul.f32 %v1734, %v1739
  %v1755 = vmul.f32 %v1735, %v1739
  %v1756 = vadd.f32 %v1608, %v1740
  %v1757 = vadd.f32 %v1609, %v1741
  %v1758 = vadd.f32 %v1610, %v1742
  %v1759 = vadd.f32 %v1611, %v1743
  %v1760 = vadd.f32 %v1612, %v1744
  %v1761 = vadd.f32 %v1613, %v1745
  %v1762 = vadd.f32 %v1614, %v1746
  %v1763 = vadd.f32 %v1615, %v1747
  %v1764 = vadd.f32 %v1616, %v1748
  %v1765 = vadd.f32 %v1617, %v1749
  %v1766 = vadd.f32 %v1618, %v1750
  %v1767 = vadd.f32 %v1619, %v1751
  %v1768 = vadd.f32 %v1620, %v1752
  %v1769 = vadd.f32 %v1621, %v1753
  %v1770 = vadd.f32 %v1622, %v1754
  %v1771 = vadd.f32 %v1623, %v1755
  %1773 = vset.pattern.permute.xlu0 0
  %1774 = vperm.xlu0 %1773, %v746
  %v1775 = vpop.permute.xlu0 %1774
  %1778 = vset.pattern.permute.xlu0 0
  %1779 = vperm.xlu0 %1778, %v747
  %v1780 = vpop.permute.xlu0 %1779
  %1783 = vset.pattern.permute.xlu0 0
  %1784 = vperm.xlu0 %1783, %v748
  %v1785 = vpop.permute.xlu0 %1784
  %1788 = vset.pattern.permute.xlu0 0
  %1789 = vperm.xlu0 %1788, %v749
  %v1790 = vpop.permute.xlu0 %1789
  %1793 = vset.pattern.permute.xlu0 0
  %1794 = vperm.xlu0 %1793, %v750
  %v1795 = vpop.permute.xlu0 %1794
  %1798 = vset.pattern.permute.xlu0 0
  %1799 = vperm.xlu0 %1798, %v751
  %v1800 = vpop.permute.xlu0 %1799
  %1803 = vset.pattern.permute.xlu0 0
  %1804 = vperm.xlu0 %1803, %v752
  %v1805 = vpop.permute.xlu0 %1804
  %1808 = vset.pattern.permute.xlu0 0
  %1809 = vperm.xlu0 %1808, %v753
  %v1810 = vpop.permute.xlu0 %1809
  %1813 = vset.pattern.permute.xlu0 0
  %1814 = vperm.xlu0 %1813, %v754
  %v1815 = vpop.permute.xlu0 %1814
  %1818 = vset.pattern.permute.xlu0 0
  %1819 = vperm.xlu0 %1818, %v755
  %v1820 = vpop.permute.xlu0 %1819
  %1823 = vset.pattern.permute.xlu0 0
  %1824 = vperm.xlu0 %1823, %v756
  %v1825 = vpop.permute.xlu0 %1824
  %1828 = vset.pattern.permute.xlu0 0
  %1829 = vperm.xlu0 %1828, %v757
  %v1830 = vpop.permute.xlu0 %1829
  %1833 = vset.pattern.permute.xlu0 0
  %1834 = vperm.xlu0 %1833, %v758
  %v1835 = vpop.permute.xlu0 %1834
  %1838 = vset.pattern.permute.xlu0 0
  %1839 = vperm.xlu0 %1838, %v759
  %v1840 = vpop.permute.xlu0 %1839
  %1843 = vset.pattern.permute.xlu0 0
  %1844 = vperm.xlu0 %1843, %v760
  %v1845 = vpop.permute.xlu0 %1844
  %1848 = vset.pattern.permute.xlu0 0
  %1849 = vperm.xlu0 %1848, %v761
  %v1850 = vpop.permute.xlu0 %1849
  %v1852 = vmul.f32 %v651, %v1775
  %v1853 = vmul.f32 %v652, %v1780
  %v1854 = vmul.f32 %v653, %v1785
  %v1855 = vmul.f32 %v654, %v1790
  %v1856 = vmul.f32 %v655, %v1795
  %v1857 = vmul.f32 %v656, %v1800
  %v1858 = vmul.f32 %v657, %v1805
  %v1859 = vmul.f32 %v658, %v1810
  %v1860 = vmul.f32 %v659, %v1815
  %v1861 = vmul.f32 %v660, %v1820
  %v1862 = vmul.f32 %v661, %v1825
  %v1863 = vmul.f32 %v662, %v1830
  %v1864 = vmul.f32 %v663, %v1835
  %v1865 = vmul.f32 %v664, %v1840
  %v1866 = vmul.f32 %v665, %v1845
  %v1867 = vmul.f32 %v650, %v1850
  %v1868 = vlaneseq
  %v1869 = vshrl.u32 %v1868, 7
  %v1870 = vsub.s32 7, %v1869
  %v1871 = vrot.slane %v826, %v1870
  %v1872 = vmul.f32 %v1852, %v1871
  %v1873 = vmul.f32 %v1853, %v1871
  %v1874 = vmul.f32 %v1854, %v1871
  %v1875 = vmul.f32 %v1855, %v1871
  %v1876 = vmul.f32 %v1856, %v1871
  %v1877 = vmul.f32 %v1857, %v1871
  %v1878 = vmul.f32 %v1858, %v1871
  %v1879 = vmul.f32 %v1859, %v1871
  %v1880 = vmul.f32 %v1860, %v1871
  %v1881 = vmul.f32 %v1861, %v1871
  %v1882 = vmul.f32 %v1862, %v1871
  %v1883 = vmul.f32 %v1863, %v1871
  %v1884 = vmul.f32 %v1864, %v1871
  %v1885 = vmul.f32 %v1865, %v1871
  %v1886 = vmul.f32 %v1866, %v1871
  %v1887 = vmul.f32 %v1867, %v1871
  %v1888 = vadd.f32 %v1756, %v1872
  %v1889 = vadd.f32 %v1757, %v1873
  %v1890 = vadd.f32 %v1758, %v1874
  %v1891 = vadd.f32 %v1759, %v1875
  %v1892 = vadd.f32 %v1760, %v1876
  %v1893 = vadd.f32 %v1761, %v1877
  %v1894 = vadd.f32 %v1762, %v1878
  %v1895 = vadd.f32 %v1763, %v1879
  %v1896 = vadd.f32 %v1764, %v1880
  %v1897 = vadd.f32 %v1765, %v1881
  %v1898 = vadd.f32 %v1766, %v1882
  %v1899 = vadd.f32 %v1767, %v1883
  %v1900 = vadd.f32 %v1768, %v1884
  %v1901 = vadd.f32 %v1769, %v1885
  %v1902 = vadd.f32 %v1770, %v1886
  %v1903 = vadd.f32 %v1771, %v1887
  %v1904 = vmul.f32 %v746, %v810
  %v1905 = vmul.f32 %v747, %v811
  %v1906 = vmul.f32 %v748, %v812
  %v1907 = vmul.f32 %v749, %v813
  %v1908 = vmul.f32 %v750, %v814
  %v1909 = vmul.f32 %v751, %v815
  %v1910 = vmul.f32 %v752, %v816
  %v1911 = vmul.f32 %v753, %v817
  %v1912 = vmul.f32 %v754, %v818
  %v1913 = vmul.f32 %v755, %v819
  %v1914 = vmul.f32 %v756, %v820
  %v1915 = vmul.f32 %v757, %v821
  %v1916 = vmul.f32 %v758, %v822
  %v1917 = vmul.f32 %v759, %v823
  %v1918 = vmul.f32 %v760, %v824
  %v1919 = vmul.f32 %v761, %v825
  %1921 = vset.pattern.permute.xlu0 0
  %1922 = vperm.xlu0 %1921, %v1904
  %v1923 = vpop.permute.xlu0 %1922
  %1926 = vset.pattern.permute.xlu0 0
  %1927 = vperm.xlu0 %1926, %v1905
  %v1928 = vpop.permute.xlu0 %1927
  %1931 = vset.pattern.permute.xlu0 0
  %1932 = vperm.xlu0 %1931, %v1906
  %v1933 = vpop.permute.xlu0 %1932
  %1936 = vset.pattern.permute.xlu0 0
  %1937 = vperm.xlu0 %1936, %v1907
  %v1938 = vpop.permute.xlu0 %1937
  %1941 = vset.pattern.permute.xlu0 0
  %1942 = vperm.xlu0 %1941, %v1908
  %v1943 = vpop.permute.xlu0 %1942
  %1946 = vset.pattern.permute.xlu0 0
  %1947 = vperm.xlu0 %1946, %v1909
  %v1948 = vpop.permute.xlu0 %1947
  %1951 = vset.pattern.permute.xlu0 0
  %1952 = vperm.xlu0 %1951, %v1910
  %v1953 = vpop.permute.xlu0 %1952
  %1956 = vset.pattern.permute.xlu0 0
  %1957 = vperm.xlu0 %1956, %v1911
  %v1958 = vpop.permute.xlu0 %1957
  %1961 = vset.pattern.permute.xlu0 0
  %1962 = vperm.xlu0 %1961, %v1912
  %v1963 = vpop.permute.xlu0 %1962
  %1966 = vset.pattern.permute.xlu0 0
  %1967 = vperm.xlu0 %1966, %v1913
  %v1968 = vpop.permute.xlu0 %1967
  %1971 = vset.pattern.permute.xlu0 0
  %1972 = vperm.xlu0 %1971, %v1914
  %v1973 = vpop.permute.xlu0 %1972
  %1976 = vset.pattern.permute.xlu0 0
  %1977 = vperm.xlu0 %1976, %v1915
  %v1978 = vpop.permute.xlu0 %1977
  %1981 = vset.pattern.permute.xlu0 0
  %1982 = vperm.xlu0 %1981, %v1916
  %v1983 = vpop.permute.xlu0 %1982
  %1986 = vset.pattern.permute.xlu0 0
  %1987 = vperm.xlu0 %1986, %v1917
  %v1988 = vpop.permute.xlu0 %1987
  %1991 = vset.pattern.permute.xlu0 0
  %1992 = vperm.xlu0 %1991, %v1918
  %v1993 = vpop.permute.xlu0 %1992
  %1996 = vset.pattern.permute.xlu0 0
  %1997 = vperm.xlu0 %1996, %v1919
  %v1998 = vpop.permute.xlu0 %1997
  %v2000 = vmul.f32 %v1173, %v1923
  %v2001 = vmul.f32 %v1172, %v1928
  %v2002 = vmul.f32 %v1171, %v1933
  %v2003 = vmul.f32 %v1170, %v1938
  %v2004 = vmul.f32 %v1169, %v1943
  %v2005 = vmul.f32 %v1168, %v1948
  %v2006 = vmul.f32 %v1167, %v1953
  %v2007 = vmul.f32 %v1166, %v1958
  %v2008 = vmul.f32 %v1165, %v1963
  %v2009 = vmul.f32 %v1164, %v1968
  %v2010 = vmul.f32 %v1163, %v1973
  %v2011 = vmul.f32 %v1162, %v1978
  %v2012 = vmul.f32 %v1161, %v1983
  %v2013 = vmul.f32 %v1160, %v1988
  %v2014 = vmul.f32 %v1175, %v1993
  %v2015 = vmul.f32 %v1174, %v1998
  %v2016 = vlaneseq
  %v2017 = vshrl.u32 %v2016, 7
  %v2018 = vsub.s32 0, %v2017
  %v2019 = vrot.slane %v827, %v2018
  %v2020 = vmul.f32 %v2000, %v2019
  %v2021 = vmul.f32 %v2001, %v2019
  %v2022 = vmul.f32 %v2002, %v2019
  %v2023 = vmul.f32 %v2003, %v2019
  %v2024 = vmul.f32 %v2004, %v2019
  %v2025 = vmul.f32 %v2005, %v2019
  %v2026 = vmul.f32 %v2006, %v2019
  %v2027 = vmul.f32 %v2007, %v2019
  %v2028 = vmul.f32 %v2008, %v2019
  %v2029 = vmul.f32 %v2009, %v2019
  %v2030 = vmul.f32 %v2010, %v2019
  %v2031 = vmul.f32 %v2011, %v2019
  %v2032 = vmul.f32 %v2012, %v2019
  %v2033 = vmul.f32 %v2013, %v2019
  %v2034 = vmul.f32 %v2014, %v2019
  %v2035 = vmul.f32 %v2015, %v2019
  %v2036 = vadd.f32 %v1888, %v2020
  %v2037 = vadd.f32 %v1889, %v2021
  %v2038 = vadd.f32 %v1890, %v2022
  %v2039 = vadd.f32 %v1891, %v2023
  %v2040 = vadd.f32 %v1892, %v2024
  %v2041 = vadd.f32 %v1893, %v2025
  %v2042 = vadd.f32 %v1894, %v2026
  %v2043 = vadd.f32 %v1895, %v2027
  %v2044 = vadd.f32 %v1896, %v2028
  %v2045 = vadd.f32 %v1897, %v2029
  %v2046 = vadd.f32 %v1898, %v2030
  %v2047 = vadd.f32 %v1899, %v2031
  %v2048 = vadd.f32 %v1900, %v2032
  %v2049 = vadd.f32 %v1901, %v2033
  %v2050 = vadd.f32 %v1902, %v2034
  %v2051 = vadd.f32 %v1903, %v2035
  %v2052 = vld [vmem:[%s6] sm:$0x1]
  %v2054 = vlaneseq
  %v2055 = vshrl.u32 %v2054, 7
  %v2056 = vsub.s32 0, %v2055
  %v2057 = vrot.slane %v2052, %v2056
  %v2059 = vadd.f32 %v2036, %v2057
  %v2060 = vadd.f32 %v2037, %v2057
  %v2061 = vadd.f32 %v2038, %v2057
  %v2062 = vadd.f32 %v2039, %v2057
  %v2063 = vadd.f32 %v2040, %v2057
  %v2064 = vadd.f32 %v2041, %v2057
  %v2065 = vadd.f32 %v2042, %v2057
  %v2066 = vadd.f32 %v2043, %v2057
  %v2067 = vadd.f32 %v2044, %v2057
  %v2068 = vadd.f32 %v2045, %v2057
  %v2069 = vadd.f32 %v2046, %v2057
  %v2070 = vadd.f32 %v2047, %v2057
  %v2071 = vadd.f32 %v2048, %v2057
  %v2072 = vadd.f32 %v2049, %v2057
  %v2073 = vadd.f32 %v2050, %v2057
  %v2074 = vadd.f32 %v2051, %v2057
  %v2075 = vmul.f32 %v2059, 0.5
  %v2076 = vmul.f32 %v2060, 0.5
  %v2077 = vmul.f32 %v2061, 0.5
  %v2078 = vmul.f32 %v2062, 0.5
  %v2079 = vmul.f32 %v2063, 0.5
  %v2080 = vmul.f32 %v2064, 0.5
  %v2081 = vmul.f32 %v2065, 0.5
  %v2082 = vmul.f32 %v2066, 0.5
  %v2083 = vmul.f32 %v2067, 0.5
  %v2084 = vmul.f32 %v2068, 0.5
  %v2085 = vmul.f32 %v2069, 0.5
  %v2086 = vmul.f32 %v2070, 0.5
  %v2087 = vmul.f32 %v2071, 0.5
  %v2088 = vmul.f32 %v2072, 0.5
  %v2089 = vmul.f32 %v2073, 0.5
  %v2090 = vmul.f32 %v2074, 0.5
  %v2091 = vmul.f32 %v2059, 0.70710677
  %v2092 = vmul.f32 %v2060, 0.70710677
  %v2093 = vmul.f32 %v2061, 0.70710677
  %v2094 = vmul.f32 %v2062, 0.70710677
  %v2095 = vmul.f32 %v2063, 0.70710677
  %v2096 = vmul.f32 %v2064, 0.70710677
  %v2097 = vmul.f32 %v2065, 0.70710677
  %v2098 = vmul.f32 %v2066, 0.70710677
  %v2099 = vmul.f32 %v2067, 0.70710677
  %v2100 = vmul.f32 %v2068, 0.70710677
  %v2101 = vmul.f32 %v2069, 0.70710677
  %v2102 = vmul.f32 %v2070, 0.70710677
  %v2103 = vmul.f32 %v2071, 0.70710677
  %v2104 = vmul.f32 %v2072, 0.70710677
  %v2105 = vmul.f32 %v2073, 0.70710677
  %v2106 = vmul.f32 %v2074, 0.70710677
  %vm2107 = vcmp.lt.f32.partialorder %v2091, 0.0
  %vm2108 = vcmp.lt.f32.partialorder %v2092, 0.0
  %vm2109 = vcmp.lt.f32.partialorder %v2093, 0.0
  %vm2110 = vcmp.lt.f32.partialorder %v2094, 0.0
  %vm2111 = vcmp.lt.f32.partialorder %v2095, 0.0
  %vm2112 = vcmp.lt.f32.partialorder %v2096, 0.0
  %vm2113 = vcmp.lt.f32.partialorder %v2097, 0.0
  %vm2114 = vcmp.lt.f32.partialorder %v2098, 0.0
  %vm2115 = vcmp.lt.f32.partialorder %v2099, 0.0
  %vm2116 = vcmp.lt.f32.partialorder %v2100, 0.0
  %vm2117 = vcmp.lt.f32.partialorder %v2101, 0.0
  %vm2118 = vcmp.lt.f32.partialorder %v2102, 0.0
  %vm2119 = vcmp.lt.f32.partialorder %v2103, 0.0
  %vm2120 = vcmp.lt.f32.partialorder %v2104, 0.0
  %vm2121 = vcmp.lt.f32.partialorder %v2105, 0.0
  %vm2122 = vcmp.lt.f32.partialorder %v2106, 0.0
  %v2123 = vsel %vm2107, -1.0, 1.0
  %v2124 = vsel %vm2108, -1.0, 1.0
  %v2125 = vsel %vm2109, -1.0, 1.0
  %v2126 = vsel %vm2110, -1.0, 1.0
  %v2127 = vsel %vm2111, -1.0, 1.0
  %v2128 = vsel %vm2112, -1.0, 1.0
  %v2129 = vsel %vm2113, -1.0, 1.0
  %v2130 = vsel %vm2114, -1.0, 1.0
  %v2131 = vsel %vm2115, -1.0, 1.0
  %v2132 = vsel %vm2116, -1.0, 1.0
  %v2133 = vsel %vm2117, -1.0, 1.0
  %v2134 = vsel %vm2118, -1.0, 1.0
  %v2135 = vsel %vm2119, -1.0, 1.0
  %v2136 = vsel %vm2120, -1.0, 1.0
  %v2137 = vsel %vm2121, -1.0, 1.0
  %v2138 = vsel %vm2122, -1.0, 1.0
  %v2139 = vand.u32 2147483647, %v2091
  %v2140 = vand.u32 2147483647, %v2092
  %v2141 = vand.u32 2147483647, %v2093
  %v2142 = vand.u32 2147483647, %v2094
  %v2143 = vand.u32 2147483647, %v2095
  %v2144 = vand.u32 2147483647, %v2096
  %v2145 = vand.u32 2147483647, %v2097
  %v2146 = vand.u32 2147483647, %v2098
  %v2147 = vand.u32 2147483647, %v2099
  %v2148 = vand.u32 2147483647, %v2100
  %v2149 = vand.u32 2147483647, %v2101
  %v2150 = vand.u32 2147483647, %v2102
  %v2151 = vand.u32 2147483647, %v2103
  %v2152 = vand.u32 2147483647, %v2104
  %v2153 = vand.u32 2147483647, %v2105
  %v2154 = vand.u32 2147483647, %v2106
  %v2155 = vmul.f32 %v2139, 0.3275911
  %v2156 = vmul.f32 %v2140, 0.3275911
  %v2157 = vmul.f32 %v2141, 0.3275911
  %v2158 = vmul.f32 %v2142, 0.3275911
  %v2159 = vmul.f32 %v2143, 0.3275911
  %v2160 = vmul.f32 %v2144, 0.3275911
  %v2161 = vmul.f32 %v2145, 0.3275911
  %v2162 = vmul.f32 %v2146, 0.3275911
  %v2163 = vmul.f32 %v2147, 0.3275911
  %v2164 = vmul.f32 %v2148, 0.3275911
  %v2165 = vmul.f32 %v2149, 0.3275911
  %v2166 = vmul.f32 %v2150, 0.3275911
  %v2167 = vmul.f32 %v2151, 0.3275911
  %v2168 = vmul.f32 %v2152, 0.3275911
  %v2169 = vmul.f32 %v2153, 0.3275911
  %v2170 = vmul.f32 %v2154, 0.3275911
  %v2171 = vadd.f32 %v2155, 1.0
  %v2172 = vadd.f32 %v2156, 1.0
  %v2173 = vadd.f32 %v2157, 1.0
  %v2174 = vadd.f32 %v2158, 1.0
  %v2175 = vadd.f32 %v2159, 1.0
  %v2176 = vadd.f32 %v2160, 1.0
  %v2177 = vadd.f32 %v2161, 1.0
  %v2178 = vadd.f32 %v2162, 1.0
  %v2179 = vadd.f32 %v2163, 1.0
  %v2180 = vadd.f32 %v2164, 1.0
  %v2181 = vadd.f32 %v2165, 1.0
  %v2182 = vadd.f32 %v2166, 1.0
  %v2183 = vadd.f32 %v2167, 1.0
  %v2184 = vadd.f32 %v2168, 1.0
  %v2185 = vadd.f32 %v2169, 1.0
  %v2186 = vadd.f32 %v2170, 1.0
  %v2187 = vrcp.pop %v2171
  %v2188 = vrcp.pop %v2172
  %v2189 = vrcp.pop %v2173
  %v2190 = vrcp.pop %v2174
  %v2191 = vrcp.pop %v2175
  %v2192 = vrcp.pop %v2176
  %v2193 = vrcp.pop %v2177
  %v2194 = vrcp.pop %v2178
  %v2195 = vrcp.pop %v2179
  %v2196 = vrcp.pop %v2180
  %v2197 = vrcp.pop %v2181
  %v2198 = vrcp.pop %v2182
  %v2199 = vrcp.pop %v2183
  %v2200 = vrcp.pop %v2184
  %v2201 = vrcp.pop %v2185
  %v2202 = vrcp.pop %v2186
  %v2203 = vmul.f32 %v2171, %v2187
  %v2204 = vmul.f32 %v2172, %v2188
  %v2205 = vmul.f32 %v2173, %v2189
  %v2206 = vmul.f32 %v2174, %v2190
  %v2207 = vmul.f32 %v2175, %v2191
  %v2208 = vmul.f32 %v2176, %v2192
  %v2209 = vmul.f32 %v2177, %v2193
  %v2210 = vmul.f32 %v2178, %v2194
  %v2211 = vmul.f32 %v2179, %v2195
  %v2212 = vmul.f32 %v2180, %v2196
  %v2213 = vmul.f32 %v2181, %v2197
  %v2214 = vmul.f32 %v2182, %v2198
  %v2215 = vmul.f32 %v2183, %v2199
  %v2216 = vmul.f32 %v2184, %v2200
  %v2217 = vmul.f32 %v2185, %v2201
  %v2218 = vmul.f32 %v2186, %v2202
  %v2219 = vsub.f32 2.0, %v2203
  %v2220 = vsub.f32 2.0, %v2204
  %v2221 = vsub.f32 2.0, %v2205
  %v2222 = vsub.f32 2.0, %v2206
  %v2223 = vsub.f32 2.0, %v2207
  %v2224 = vsub.f32 2.0, %v2208
  %v2225 = vsub.f32 2.0, %v2209
  %v2226 = vsub.f32 2.0, %v2210
  %v2227 = vsub.f32 2.0, %v2211
  %v2228 = vsub.f32 2.0, %v2212
  %v2229 = vsub.f32 2.0, %v2213
  %v2230 = vsub.f32 2.0, %v2214
  %v2231 = vsub.f32 2.0, %v2215
  %v2232 = vsub.f32 2.0, %v2216
  %v2233 = vsub.f32 2.0, %v2217
  %v2234 = vsub.f32 2.0, %v2218
  %v2235 = vmul.f32 %v2187, %v2219
  %v2236 = vmul.f32 %v2188, %v2220
  %v2237 = vmul.f32 %v2189, %v2221
  %v2238 = vmul.f32 %v2190, %v2222
  %v2239 = vmul.f32 %v2191, %v2223
  %v2240 = vmul.f32 %v2192, %v2224
  %v2241 = vmul.f32 %v2193, %v2225
  %v2242 = vmul.f32 %v2194, %v2226
  %v2243 = vmul.f32 %v2195, %v2227
  %v2244 = vmul.f32 %v2196, %v2228
  %v2245 = vmul.f32 %v2197, %v2229
  %v2246 = vmul.f32 %v2198, %v2230
  %v2247 = vmul.f32 %v2199, %v2231
  %v2248 = vmul.f32 %v2200, %v2232
  %v2249 = vmul.f32 %v2201, %v2233
  %v2250 = vmul.f32 %v2202, %v2234
  %v2251 = vmul.f32 %v2235, 1.0614054
  %v2252 = vmul.f32 %v2236, 1.0614054
  %v2253 = vmul.f32 %v2237, 1.0614054
  %v2254 = vmul.f32 %v2238, 1.0614054
  %v2255 = vmul.f32 %v2239, 1.0614054
  %v2256 = vmul.f32 %v2240, 1.0614054
  %v2257 = vmul.f32 %v2241, 1.0614054
  %v2258 = vmul.f32 %v2242, 1.0614054
  %v2259 = vmul.f32 %v2243, 1.0614054
  %v2260 = vmul.f32 %v2244, 1.0614054
  %v2261 = vmul.f32 %v2245, 1.0614054
  %v2262 = vmul.f32 %v2246, 1.0614054
  %v2263 = vmul.f32 %v2247, 1.0614054
  %v2264 = vmul.f32 %v2248, 1.0614054
  %v2265 = vmul.f32 %v2249, 1.0614054
  %v2266 = vmul.f32 %v2250, 1.0614054
  %v2267 = vadd.f32 %v2251, -1.4531521
  %v2268 = vadd.f32 %v2252, -1.4531521
  %v2269 = vadd.f32 %v2253, -1.4531521
  %v2270 = vadd.f32 %v2254, -1.4531521
  %v2271 = vadd.f32 %v2255, -1.4531521
  %v2272 = vadd.f32 %v2256, -1.4531521
  %v2273 = vadd.f32 %v2257, -1.4531521
  %v2274 = vadd.f32 %v2258, -1.4531521
  %v2275 = vadd.f32 %v2259, -1.4531521
  %v2276 = vadd.f32 %v2260, -1.4531521
  %v2277 = vadd.f32 %v2261, -1.4531521
  %v2278 = vadd.f32 %v2262, -1.4531521
  %v2279 = vadd.f32 %v2263, -1.4531521
  %v2280 = vadd.f32 %v2264, -1.4531521
  %v2281 = vadd.f32 %v2265, -1.4531521
  %v2282 = vadd.f32 %v2266, -1.4531521
  %v2283 = vmul.f32 %v2267, %v2235
  %v2284 = vmul.f32 %v2268, %v2236
  %v2285 = vmul.f32 %v2269, %v2237
  %v2286 = vmul.f32 %v2270, %v2238
  %v2287 = vmul.f32 %v2271, %v2239
  %v2288 = vmul.f32 %v2272, %v2240
  %v2289 = vmul.f32 %v2273, %v2241
  %v2290 = vmul.f32 %v2274, %v2242
  %v2291 = vmul.f32 %v2275, %v2243
  %v2292 = vmul.f32 %v2276, %v2244
  %v2293 = vmul.f32 %v2277, %v2245
  %v2294 = vmul.f32 %v2278, %v2246
  %v2295 = vmul.f32 %v2279, %v2247
  %v2296 = vmul.f32 %v2280, %v2248
  %v2297 = vmul.f32 %v2281, %v2249
  %v2298 = vmul.f32 %v2282, %v2250
  %v2299 = vadd.f32 %v2283, 1.4214138
  %v2300 = vadd.f32 %v2284, 1.4214138
  %v2301 = vadd.f32 %v2285, 1.4214138
  %v2302 = vadd.f32 %v2286, 1.4214138
  %v2303 = vadd.f32 %v2287, 1.4214138
  %v2304 = vadd.f32 %v2288, 1.4214138
  %v2305 = vadd.f32 %v2289, 1.4214138
  %v2306 = vadd.f32 %v2290, 1.4214138
  %v2307 = vadd.f32 %v2291, 1.4214138
  %v2308 = vadd.f32 %v2292, 1.4214138
  %v2309 = vadd.f32 %v2293, 1.4214138
  %v2310 = vadd.f32 %v2294, 1.4214138
  %v2311 = vadd.f32 %v2295, 1.4214138
  %v2312 = vadd.f32 %v2296, 1.4214138
  %v2313 = vadd.f32 %v2297, 1.4214138
  %v2314 = vadd.f32 %v2298, 1.4214138
  %v2315 = vmul.f32 %v2299, %v2235
  %v2316 = vmul.f32 %v2300, %v2236
  %v2317 = vmul.f32 %v2301, %v2237
  %v2318 = vmul.f32 %v2302, %v2238
  %v2319 = vmul.f32 %v2303, %v2239
  %v2320 = vmul.f32 %v2304, %v2240
  %v2321 = vmul.f32 %v2305, %v2241
  %v2322 = vmul.f32 %v2306, %v2242
  %v2323 = vmul.f32 %v2307, %v2243
  %v2324 = vmul.f32 %v2308, %v2244
  %v2325 = vmul.f32 %v2309, %v2245
  %v2326 = vmul.f32 %v2310, %v2246
  %v2327 = vmul.f32 %v2311, %v2247
  %v2328 = vmul.f32 %v2312, %v2248
  %v2329 = vmul.f32 %v2313, %v2249
  %v2330 = vmul.f32 %v2314, %v2250
  %v2331 = vadd.f32 %v2315, -0.28449672
  %v2332 = vadd.f32 %v2316, -0.28449672
  %v2333 = vadd.f32 %v2317, -0.28449672
  %v2334 = vadd.f32 %v2318, -0.28449672
  %v2335 = vadd.f32 %v2319, -0.28449672
  %v2336 = vadd.f32 %v2320, -0.28449672
  %v2337 = vadd.f32 %v2321, -0.28449672
  %v2338 = vadd.f32 %v2322, -0.28449672
  %v2339 = vadd.f32 %v2323, -0.28449672
  %v2340 = vadd.f32 %v2324, -0.28449672
  %v2341 = vadd.f32 %v2325, -0.28449672
  %v2342 = vadd.f32 %v2326, -0.28449672
  %v2343 = vadd.f32 %v2327, -0.28449672
  %v2344 = vadd.f32 %v2328, -0.28449672
  %v2345 = vadd.f32 %v2329, -0.28449672
  %v2346 = vadd.f32 %v2330, -0.28449672
  %v2347 = vmul.f32 %v2331, %v2235
  %v2348 = vmul.f32 %v2332, %v2236
  %v2349 = vmul.f32 %v2333, %v2237
  %v2350 = vmul.f32 %v2334, %v2238
  %v2351 = vmul.f32 %v2335, %v2239
  %v2352 = vmul.f32 %v2336, %v2240
  %v2353 = vmul.f32 %v2337, %v2241
  %v2354 = vmul.f32 %v2338, %v2242
  %v2355 = vmul.f32 %v2339, %v2243
  %v2356 = vmul.f32 %v2340, %v2244
  %v2357 = vmul.f32 %v2341, %v2245
  %v2358 = vmul.f32 %v2342, %v2246
  %v2359 = vmul.f32 %v2343, %v2247
  %v2360 = vmul.f32 %v2344, %v2248
  %v2361 = vmul.f32 %v2345, %v2249
  %v2362 = vmul.f32 %v2346, %v2250
  %v2363 = vadd.f32 %v2347, 0.2548296
  %v2364 = vadd.f32 %v2348, 0.2548296
  %v2365 = vadd.f32 %v2349, 0.2548296
  %v2366 = vadd.f32 %v2350, 0.2548296
  %v2367 = vadd.f32 %v2351, 0.2548296
  %v2368 = vadd.f32 %v2352, 0.2548296
  %v2369 = vadd.f32 %v2353, 0.2548296
  %v2370 = vadd.f32 %v2354, 0.2548296
  %v2371 = vadd.f32 %v2355, 0.2548296
  %v2372 = vadd.f32 %v2356, 0.2548296
  %v2373 = vadd.f32 %v2357, 0.2548296
  %v2374 = vadd.f32 %v2358, 0.2548296
  %v2375 = vadd.f32 %v2359, 0.2548296
  %v2376 = vadd.f32 %v2360, 0.2548296
  %v2377 = vadd.f32 %v2361, 0.2548296
  %v2378 = vadd.f32 %v2362, 0.2548296
  %v2379 = vmul.f32 %v2363, %v2235
  %v2380 = vmul.f32 %v2364, %v2236
  %v2381 = vmul.f32 %v2365, %v2237
  %v2382 = vmul.f32 %v2366, %v2238
  %v2383 = vmul.f32 %v2367, %v2239
  %v2384 = vmul.f32 %v2368, %v2240
  %v2385 = vmul.f32 %v2369, %v2241
  %v2386 = vmul.f32 %v2370, %v2242
  %v2387 = vmul.f32 %v2371, %v2243
  %v2388 = vmul.f32 %v2372, %v2244
  %v2389 = vmul.f32 %v2373, %v2245
  %v2390 = vmul.f32 %v2374, %v2246
  %v2391 = vmul.f32 %v2375, %v2247
  %v2392 = vmul.f32 %v2376, %v2248
  %v2393 = vmul.f32 %v2377, %v2249
  %v2394 = vmul.f32 %v2378, %v2250
  %v2395 = vsub.f32 0.0, %v2139
  %v2396 = vsub.f32 0.0, %v2140
  %v2397 = vsub.f32 0.0, %v2141
  %v2398 = vsub.f32 0.0, %v2142
  %v2399 = vsub.f32 0.0, %v2143
  %v2400 = vsub.f32 0.0, %v2144
  %v2401 = vsub.f32 0.0, %v2145
  %v2402 = vsub.f32 0.0, %v2146
  %v2403 = vsub.f32 0.0, %v2147
  %v2404 = vsub.f32 0.0, %v2148
  %v2405 = vsub.f32 0.0, %v2149
  %v2406 = vsub.f32 0.0, %v2150
  %v2407 = vsub.f32 0.0, %v2151
  %v2408 = vsub.f32 0.0, %v2152
  %v2409 = vsub.f32 0.0, %v2153
  %v2410 = vsub.f32 0.0, %v2154
  %v2411 = vmul.f32 %v2395, %v2139
  %v2412 = vmul.f32 %v2396, %v2140
  %v2413 = vmul.f32 %v2397, %v2141
  %v2414 = vmul.f32 %v2398, %v2142
  %v2415 = vmul.f32 %v2399, %v2143
  %v2416 = vmul.f32 %v2400, %v2144
  %v2417 = vmul.f32 %v2401, %v2145
  %v2418 = vmul.f32 %v2402, %v2146
  %v2419 = vmul.f32 %v2403, %v2147
  %v2420 = vmul.f32 %v2404, %v2148
  %v2421 = vmul.f32 %v2405, %v2149
  %v2422 = vmul.f32 %v2406, %v2150
  %v2423 = vmul.f32 %v2407, %v2151
  %v2424 = vmul.f32 %v2408, %v2152
  %v2425 = vmul.f32 %v2409, %v2153
  %v2426 = vmul.f32 %v2410, %v2154
  %v2427 = vmul.f32 %v2411, 1.442695
  %v2428 = vpow.pop %v2427
  %v2429 = vmul.f32 %v2412, 1.442695
  %v2430 = vpow.pop %v2429
  %v2431 = vmul.f32 %v2413, 1.442695
  %v2432 = vpow.pop %v2431
  %v2433 = vmul.f32 %v2414, 1.442695
  %v2434 = vpow.pop %v2433
  %v2435 = vmul.f32 %v2415, 1.442695
  %v2436 = vpow.pop %v2435
  %v2437 = vmul.f32 %v2416, 1.442695
  %v2438 = vpow.pop %v2437
  %v2439 = vmul.f32 %v2417, 1.442695
  %v2440 = vpow.pop %v2439
  %v2441 = vmul.f32 %v2418, 1.442695
  %v2442 = vpow.pop %v2441
  %v2443 = vmul.f32 %v2419, 1.442695
  %v2444 = vpow.pop %v2443
  %v2445 = vmul.f32 %v2420, 1.442695
  %v2446 = vpow.pop %v2445
  %v2447 = vmul.f32 %v2421, 1.442695
  %v2448 = vpow.pop %v2447
  %v2449 = vmul.f32 %v2422, 1.442695
  %v2450 = vpow.pop %v2449
  %v2451 = vmul.f32 %v2423, 1.442695
  %v2452 = vpow.pop %v2451
  %v2453 = vmul.f32 %v2424, 1.442695
  %v2454 = vpow.pop %v2453
  %v2455 = vmul.f32 %v2425, 1.442695
  %v2456 = vpow.pop %v2455
  %v2457 = vmul.f32 %v2426, 1.442695
  %v2458 = vpow.pop %v2457
  %v2459 = vmul.f32 %v2379, %v2428
  %v2460 = vmul.f32 %v2380, %v2430
  %v2461 = vmul.f32 %v2381, %v2432
  %v2462 = vmul.f32 %v2382, %v2434
  %v2463 = vmul.f32 %v2383, %v2436
  %v2464 = vmul.f32 %v2384, %v2438
  %v2465 = vmul.f32 %v2385, %v2440
  %v2466 = vmul.f32 %v2386, %v2442
  %v2467 = vmul.f32 %v2387, %v2444
  %v2468 = vmul.f32 %v2388, %v2446
  %v2469 = vmul.f32 %v2389, %v2448
  %v2470 = vmul.f32 %v2390, %v2450
  %v2471 = vmul.f32 %v2391, %v2452
  %v2472 = vmul.f32 %v2392, %v2454
  %v2473 = vmul.f32 %v2393, %v2456
  %v2474 = vmul.f32 %v2394, %v2458
  %v2475 = vsub.f32 1.0, %v2459
  %v2476 = vsub.f32 1.0, %v2460
  %v2477 = vsub.f32 1.0, %v2461
  %v2478 = vsub.f32 1.0, %v2462
  %v2479 = vsub.f32 1.0, %v2463
  %v2480 = vsub.f32 1.0, %v2464
  %v2481 = vsub.f32 1.0, %v2465
  %v2482 = vsub.f32 1.0, %v2466
  %v2483 = vsub.f32 1.0, %v2467
  %v2484 = vsub.f32 1.0, %v2468
  %v2485 = vsub.f32 1.0, %v2469
  %v2486 = vsub.f32 1.0, %v2470
  %v2487 = vsub.f32 1.0, %v2471
  %v2488 = vsub.f32 1.0, %v2472
  %v2489 = vsub.f32 1.0, %v2473
  %v2490 = vsub.f32 1.0, %v2474
  %v2491 = vmul.f32 %v2123, %v2475
  %v2492 = vmul.f32 %v2124, %v2476
  %v2493 = vmul.f32 %v2125, %v2477
  %v2494 = vmul.f32 %v2126, %v2478
  %v2495 = vmul.f32 %v2127, %v2479
  %v2496 = vmul.f32 %v2128, %v2480
  %v2497 = vmul.f32 %v2129, %v2481
  %v2498 = vmul.f32 %v2130, %v2482
  %v2499 = vmul.f32 %v2131, %v2483
  %v2500 = vmul.f32 %v2132, %v2484
  %v2501 = vmul.f32 %v2133, %v2485
  %v2502 = vmul.f32 %v2134, %v2486
  %v2503 = vmul.f32 %v2135, %v2487
  %v2504 = vmul.f32 %v2136, %v2488
  %v2505 = vmul.f32 %v2137, %v2489
  %v2506 = vmul.f32 %v2138, %v2490
  %v2507 = vadd.f32 %v2491, 1.0
  %v2508 = vadd.f32 %v2492, 1.0
  %v2509 = vadd.f32 %v2493, 1.0
  %v2510 = vadd.f32 %v2494, 1.0
  %v2511 = vadd.f32 %v2495, 1.0
  %v2512 = vadd.f32 %v2496, 1.0
  %v2513 = vadd.f32 %v2497, 1.0
  %v2514 = vadd.f32 %v2498, 1.0
  %v2515 = vadd.f32 %v2499, 1.0
  %v2516 = vadd.f32 %v2500, 1.0
  %v2517 = vadd.f32 %v2501, 1.0
  %v2518 = vadd.f32 %v2502, 1.0
  %v2519 = vadd.f32 %v2503, 1.0
  %v2520 = vadd.f32 %v2504, 1.0
  %v2521 = vadd.f32 %v2505, 1.0
  %v2522 = vadd.f32 %v2506, 1.0
  %v2523 = vmul.f32 %v2075, %v2507
  %v2524 = vmul.f32 %v2076, %v2508
  %v2525 = vmul.f32 %v2077, %v2509
  %v2526 = vmul.f32 %v2078, %v2510
  %v2527 = vmul.f32 %v2079, %v2511
  %v2528 = vmul.f32 %v2080, %v2512
  %v2529 = vmul.f32 %v2081, %v2513
  %v2530 = vmul.f32 %v2082, %v2514
  %v2531 = vmul.f32 %v2083, %v2515
  %v2532 = vmul.f32 %v2084, %v2516
  %v2533 = vmul.f32 %v2085, %v2517
  %v2534 = vmul.f32 %v2086, %v2518
  %v2535 = vmul.f32 %v2087, %v2519
  %v2536 = vmul.f32 %v2088, %v2520
  %v2537 = vmul.f32 %v2089, %v2521
  %v2538 = vmul.f32 %v2090, %v2522
  %v2539 = vpack.c.bf16 %v2524, %v2523
  %v2540 = vpack.c.bf16 %v2526, %v2525
  %v2541 = vpack.c.bf16 %v2528, %v2527
  %v2542 = vpack.c.bf16 %v2530, %v2529
  %v2543 = vpack.c.bf16 %v2532, %v2531
  %v2544 = vpack.c.bf16 %v2534, %v2533
  %v2545 = vpack.c.bf16 %v2536, %v2535
  %v2546 = vpack.c.bf16 %v2538, %v2537
  %v2547 = vld [vmem:[%s7] sm:$0xf]
  %v2548 = vld [vmem:[%s7 + $0x4] sm:$0xf]
  %v2549 = vld [vmem:[%s7 + $0x8] sm:$0xf]
  %v2550 = vld [vmem:[%s7 + $0xc] sm:$0xf]
  %v2551 = vld [vmem:[%s7 + $0x10] sm:$0xf]
  %v2552 = vld [vmem:[%s7 + $0x14] sm:$0xf]
  %v2553 = vld [vmem:[%s7 + $0x18] sm:$0xf]
  %v2554 = vld [vmem:[%s7 + $0x1c] sm:$0xf]
  %v2555 = vld [vmem:[%s7 + $0x20] sm:$0xf]
  %v2556 = vld [vmem:[%s7 + $0x24] sm:$0xf]
  %v2557 = vld [vmem:[%s7 + $0x28] sm:$0xf]
  %v2558 = vld [vmem:[%s7 + $0x2c] sm:$0xf]
  %v2559 = vld [vmem:[%s7 + $0x30] sm:$0xf]
  %v2560 = vld [vmem:[%s7 + $0x34] sm:$0xf]
  %v2561 = vld [vmem:[%s7 + $0x38] sm:$0xf]
  %v2562 = vld [vmem:[%s7 + $0x3c] sm:$0xf]
  %v2563 = vld [vmem:[%s8] sm:$0x1]
  %v2565 = vlaneseq
  %v2566 = vshrl.u32 %v2565, 7
  %v2567 = vsub.s32 0, %v2566
  %v2568 = vrot.slane %v2563, %v2567
  %v2586 = vunpack.c.l.b16 %v2547
  %v2587 = vunpack.c.l.b16 %v2548
  %v2588 = vunpack.c.l.b16 %v2549
  %v2589 = vunpack.c.l.b16 %v2550
  %v2590 = vunpack.c.l.b16 %v2551
  %v2591 = vunpack.c.l.b16 %v2552
  %v2592 = vunpack.c.l.b16 %v2553
  %v2593 = vunpack.c.l.b16 %v2554
  %v2594 = vunpack.c.l.b16 %v2555
  %v2595 = vunpack.c.l.b16 %v2556
  %v2596 = vunpack.c.l.b16 %v2557
  %v2597 = vunpack.c.l.b16 %v2558
  %v2598 = vunpack.c.l.b16 %v2559
  %v2599 = vunpack.c.l.b16 %v2560
  %v2600 = vunpack.c.l.b16 %v2561
  %v2601 = vunpack.c.l.b16 %v2562
  %v2602 = vpack.c.b16 %v2587, %v2586
  %v2603 = vpack.c.b16 %v2589, %v2588
  %v2604 = vpack.c.b16 %v2591, %v2590
  %v2605 = vpack.c.b16 %v2593, %v2592
  %v2606 = vpack.c.b16 %v2595, %v2594
  %v2607 = vpack.c.b16 %v2597, %v2596
  %v2608 = vpack.c.b16 %v2599, %v2598
  %v2609 = vpack.c.b16 %v2601, %v2600
  %2618 = vmatprep.subr.bf16.mxu0 0
  %2619 = vmatpush1.bf16.msra.mxu0 %v2602
  %2620 = vmatprep.subr.bf16.mxu0 0
  %2621 = vmatpush1.bf16.msra.mxu0 %v2603
  %2622 = vmatprep.subr.bf16.mxu0 0
  %2623 = vmatpush1.bf16.msra.mxu0 %v2604
  %2624 = vmatprep.subr.bf16.mxu0 0
  %2625 = vmatpush1.bf16.msra.mxu0 %v2605
  %2626 = vmatprep.subr.bf16.mxu0 0
  %2627 = vmatpush1.bf16.msra.mxu0 %v2606
  %2628 = vmatprep.subr.bf16.mxu0 0
  %2629 = vmatpush1.bf16.msra.mxu0 %v2607
  %2630 = vmatprep.subr.bf16.mxu0 0
  %2631 = vmatpush1.bf16.msra.mxu0 %v2608
  %2632 = vmatprep.subr.bf16.mxu0 0
  %2633 = vmatpush1.bf16.msra.mxu0 %v2609
  %2634 = vmatprep.subr.bf16.mxu0 0
  %2635 = vmatpush1.bf16.msra.mxu0 0
  %2636 = vmatprep.subr.bf16.mxu0 0
  %2637 = vmatpush1.bf16.msra.mxu0 0
  %2638 = vmatprep.subr.bf16.mxu0 0
  %2639 = vmatpush1.bf16.msra.mxu0 0
  %2640 = vmatprep.subr.bf16.mxu0 0
  %2641 = vmatpush1.bf16.msra.mxu0 0
  %2642 = vmatprep.subr.bf16.mxu0 0
  %2643 = vmatpush1.bf16.msra.mxu0 0
  %2644 = vmatprep.subr.bf16.mxu0 0
  %2645 = vmatpush1.bf16.msra.mxu0 0
  %2646 = vmatprep.subr.bf16.mxu0 0
  %2647 = vmatpush1.bf16.msra.mxu0 0
  %2648 = vmatprep.subr.bf16.mxu0 0
  %2649 = vmatpush1.bf16.msra.mxu0 0
  %2650 = vmatprep.mubr.bf16.mxu0 0
  %2651 = vmatmul.mubr.bf16.gmra.mrb[0].mxu0 %v2539
  %v2652 = vpop.f32.mrb[0].mxu0
  %v2653 = vadd.f32 %v2568, %v2652
  %v2654 = vpop.f32.mrb[0].mxu0
  %v2655 = vpop.f32.mrb[0].mxu0
  %v2656 = vadd.f32 %v2568, %v2655
  %v2657 = vpop.f32.mrb[0].mxu0
  %2658 = vmatprep.mubr.bf16.mxu0 0
  %2659 = vmatmul.mubr.bf16.gmra.mrb[0].mxu0 %v2540
  %v2660 = vpop.f32.mrb[0].mxu0
  %v2661 = vadd.f32 %v2568, %v2660
  %v2662 = vpop.f32.mrb[0].mxu0
  %v2663 = vpop.f32.mrb[0].mxu0
  %v2664 = vadd.f32 %v2568, %v2663
  %v2665 = vpop.f32.mrb[0].mxu0
  %2666 = vmatprep.mubr.bf16.mxu0 0
  %2667 = vmatmul.mubr.bf16.gmra.mrb[0].mxu0 %v2541
  %v2668 = vpop.f32.mrb[0].mxu0
  %v2669 = vadd.f32 %v2568, %v2668
  %v2670 = vpop.f32.mrb[0].mxu0
  %v2671 = vpop.f32.mrb[0].mxu0
  %v2672 = vadd.f32 %v2568, %v2671
  %v2673 = vpop.f32.mrb[0].mxu0
  %2674 = vmatprep.mubr.bf16.mxu0 0
  %2675 = vmatmul.mubr.bf16.gmra.mrb[0].mxu0 %v2542
  %v2676 = vpop.f32.mrb[0].mxu0
  %v2677 = vadd.f32 %v2568, %v2676
  %v2678 = vpop.f32.mrb[0].mxu0
  %v2679 = vpop.f32.mrb[0].mxu0
  %v2680 = vadd.f32 %v2568, %v2679
  %v2681 = vpop.f32.mrb[0].mxu0
  %2682 = vmatprep.mubr.bf16.mxu0 0
  %2683 = vmatmul.mubr.bf16.gmra.mrb[0].mxu0 %v2543
  %v2684 = vpop.f32.mrb[0].mxu0
  %v2685 = vadd.f32 %v2568, %v2684
  %v2686 = vpop.f32.mrb[0].mxu0
  %v2687 = vpop.f32.mrb[0].mxu0
  %v2688 = vadd.f32 %v2568, %v2687
  %v2689 = vpop.f32.mrb[0].mxu0
  %2690 = vmatprep.mubr.bf16.mxu0 0
  %2691 = vmatmul.mubr.bf16.gmra.mrb[0].mxu0 %v2544
  %v2692 = vpop.f32.mrb[0].mxu0
  %v2693 = vadd.f32 %v2568, %v2692
  %v2694 = vpop.f32.mrb[0].mxu0
  %v2695 = vpop.f32.mrb[0].mxu0
  %v2696 = vadd.f32 %v2568, %v2695
  %v2697 = vpop.f32.mrb[0].mxu0
  %2698 = vmatprep.mubr.bf16.mxu0 0
  %2699 = vmatmul.mubr.bf16.gmra.mrb[0].mxu0 %v2545
  %v2700 = vpop.f32.mrb[0].mxu0
  %v2701 = vadd.f32 %v2568, %v2700
  %v2702 = vpop.f32.mrb[0].mxu0
  %v2703 = vpop.f32.mrb[0].mxu0
  %v2704 = vadd.f32 %v2568, %v2703
  %v2705 = vpop.f32.mrb[0].mxu0
  %2706 = vmatprep.mubr.bf16.mxu0 0
  %2707 = vmatmul.mubr.bf16.gmra.mrb[0].mxu0 %v2546
  %v2708 = vpop.f32.mrb[0].mxu0
  %v2709 = vadd.f32 %v2568, %v2708
  %v2710 = vpop.f32.mrb[0].mxu0
  %v2711 = vpop.f32.mrb[0].mxu0
  %v2712 = vadd.f32 %v2568, %v2711
  %v2713 = vpop.f32.mrb[0].mxu0
  %2714 = vdwg.mxu0
  %2715 = vst.msk [vmem:[%s9] sm:$0xff] %vm80, %v2653
  %2716 = vst.msk [vmem:[%s9 + $0x8] sm:$0xff] %vm80, %v2656
  %2717 = vst.msk [vmem:[%s9 + $0x10] sm:$0xff] %vm80, %v2661
  %2718 = vst.msk [vmem:[%s9 + $0x18] sm:$0xff] %vm80, %v2664
  %2719 = vst.msk [vmem:[%s9 + $0x20] sm:$0xff] %vm80, %v2669
  %2720 = vst.msk [vmem:[%s9 + $0x28] sm:$0xff] %vm80, %v2672
  %2721 = vst.msk [vmem:[%s9 + $0x30] sm:$0xff] %vm80, %v2677
  %2722 = vst.msk [vmem:[%s9 + $0x38] sm:$0xff] %vm80, %v2680
  %2723 = vst.msk [vmem:[%s9 + $0x40] sm:$0xff] %vm80, %v2685
  %2724 = vst.msk [vmem:[%s9 + $0x48] sm:$0xff] %vm80, %v2688
  %2725 = vst.msk [vmem:[%s9 + $0x50] sm:$0xff] %vm80, %v2693
  %2726 = vst.msk [vmem:[%s9 + $0x58] sm:$0xff] %vm80, %v2696
  %2727 = vst.msk [vmem:[%s9 + $0x60] sm:$0xff] %vm80, %v2701
  %2728 = vst.msk [vmem:[%s9 + $0x68] sm:$0xff] %vm80, %v2704
  %2729 = vst.msk [vmem:[%s9 + $0x70] sm:$0xff] %vm80, %v2709
  %2730 = vst.msk [vmem:[%s9 + $0x78] sm:$0xff] %vm80, %v2712
  // Predicated region
  $region38: #{tpu_custom_call.1} parent=0 // pred_check
    _
  $region39: #{tpu_custom_call.1} parent=0 // pred_check_branch
    %2732 = sbr.rel (0) target = $region41
  $region40: #{tpu_custom_call.1} parent=0 // pred_region
    _
  $region41: #{tpu_custom_call.1} parent=0 // pred_fallthru
    _
  // Predicated region
  $region42: #{tpu_custom_call.1} parent=0 // pred_check
    _
  $region43: #{tpu_custom_call.1} parent=0 // pred_check_branch
    %2734 = sbr.rel (0) target = $region45
  $region44: #{tpu_custom_call.1} parent=0 // pred_region
    _
  $region45: #{tpu_custom_call.1} parent=0 // pred_fallthru
    _

</llo_original>
